<compile_context>
chip_gen: v5e
topology: v5e:2x2
jax: 0.10.0
libtpu: 0.0.40
codegen_flags: <defaults>
</compile_context>

<pallas_src>
import functools
import math

import jax
import jax.numpy as jnp
from jax.experimental import pallas as pl
from jax.experimental.pallas import tpu as pltpu

_LN_EPS = 1e-6
_MASK_SCALE = -1e9
_HI = jax.lax.Precision.HIGHEST


# ----------------------------- packed-slab layouts -----------------------------
# Weight slab: every weight matrix is row-stacked starting at column 0 so each
# in-kernel slice is (row multiple of d_model, col 0) aligned.  Bias slab: one
# row per vector.  Both layouts are pure functions of (d_model, dff) so the
# packer and the kernel stay consistent.

def _weight_layout(d_model, dff):
  D = d_model
  entries = (('wqkv1', D, 3 * D), ('wo1', D, D), ('wqk2', D, 2 * D),
             ('wv2', D, D), ('wo2', D, D), ('w1', D, dff), ('w2', dff, D))
  layout, row = {}, 0
  for name, rows, cols in entries:
    layout[name] = (row, rows, cols)
    row += rows
  n_cols = max(c for _, _, c in entries)
  return layout, row, n_cols


def _bias_layout(d_model, dff):
  D = d_model
  entries = (('bqkv1', 3 * D), ('bo1', D), ('bqk2', 2 * D), ('bv2', D),
             ('bo2', D), ('b1', dff), ('b2', D),
             ('ln1_g', D), ('ln1_b', D), ('ln2_g', D), ('ln2_b', D),
             ('ln3_g', D), ('ln3_b', D))
  layout = {name: (i, width) for i, (name, width) in enumerate(entries)}
  n_cols = max(w for _, w in entries)
  return layout, len(entries), n_cols


# ----------------------------- fused Pallas kernel -----------------------------

def _decoder_layer_kernel(act_ref, w_ref, b_ref, out_ref, *,
                          batch, seq, d_model, num_heads, dff, eps):
  B, S, D, H = batch, seq, d_model, num_heads
  dp = D // H
  BS = B * S
  w_layout, _, _ = _weight_layout(D, dff)
  b_layout, _, _ = _bias_layout(D, dff)

  def w(name):                                     # bf16 (fan_in, fan_out)
    r, rows, cols = w_layout[name]
    return w_ref[r:r + rows, 0:cols]

  def b(name):                                     # f32 (1, fan_out)
    i, width = b_layout[name]
    return b_ref[i:i + 1, 0:width]

  def bf16(v):
    return v.astype(jnp.bfloat16)

  def dense(x, wname, bname):                      # f32 in -> f32 out, bf16 MXU
    return jnp.dot(bf16(x), w(wname),
                   preferred_element_type=jnp.float32) + b(bname)

  def layer_norm(v, gname, bname):                 # f32 throughout
    mean = jnp.mean(v, axis=-1, keepdims=True)
    cent = v - mean
    var = jnp.mean(cent * cent, axis=-1, keepdims=True)
    return cent * jax.lax.rsqrt(var + eps) * b(gname) + b(bname)

  def attention(q, k, v, mask_add):
    """Head-batched attention on (S, D) f32 inputs (batch-0 rows only).

    mask_add is additive and broadcastable to (H, S, S).  Softmax stays f32;
    only the MXU operands are bf16.
    """
    qh = q.reshape(S, H, dp).transpose(1, 0, 2)    # (H, S, dp) f32
    kh = k.reshape(S, H, dp).transpose(1, 0, 2)
    vh = v.reshape(S, H, dp).transpose(1, 0, 2)
    logits = jnp.einsum('hqd,hkd->hqk', bf16(qh), bf16(kh),
                        preferred_element_type=jnp.float32) + mask_add
    logits = logits - jnp.max(logits, axis=-1, keepdims=True)
    p = jnp.exp(logits)
    p = p * pl.reciprocal(jnp.sum(p, axis=-1, keepdims=True), approx=False)
    ctx = jnp.einsum('hqk,hkd->hqd', bf16(p), bf16(vh),
                     preferred_element_type=jnp.float32)    # (H, S, dp)
    return ctx.transpose(1, 0, 2).reshape(S, D)    # merge heads -> (S, D)

  # -------- unpack the activation / mask slab --------
  x2d = act_ref[0:BS, :]                           # (B*S, D) decoder input
  enc0 = act_ref[BS:BS + S, :]                     # (S, D)   enc_output[0]
  la0 = act_ref[BS + S:BS + 2 * S, 0:S]            # (S, S)   additive look-ahead (batch 0)
  pad0 = act_ref[BS + 2 * S:BS + 2 * S + 1, 0:S]   # (1, S)   additive padding   (batch 0)
  x0 = x2d[0:S, :]                                 # batch-0 rows of x

  # ---- mha1: self-attention over x; only out[0] is consumed (tuple-unpack quirk)
  qkv1 = dense(x0, 'wqkv1', 'bqkv1')               # (S, 3D), 1/sqrt(dp) folded into Q
  ctx1 = attention(qkv1[:, 0:D], qkv1[:, D:2 * D], qkv1[:, 2 * D:3 * D],
                   la0[None, :, :])
  attn1 = jnp.dot(bf16(ctx1), w('wo1'),
                  preferred_element_type=jnp.float32) + b('bo1')   # (S, D)
  out1 = layer_norm((x2d.reshape(B, S, D) + attn1[None, :, :]).reshape(BS, D),
                    'ln1_g', 'ln1_b')

  # ---- mha2: Q = K = enc_output, V = out1 (reference call order); batch-0 only
  qk2 = dense(enc0, 'wqk2', 'bqk2')                # (S, 2D)
  v2 = dense(out1[0:S, :], 'wv2', 'bv2')           # (S, D)
  ctx2 = attention(qk2[:, 0:D], qk2[:, D:2 * D], v2, pad0.reshape(1, 1, S))
  attn2 = jnp.dot(bf16(ctx2), w('wo2'),
                  preferred_element_type=jnp.float32) + b('bo2')
  out2 = layer_norm((out1.reshape(B, S, D) + attn2[None, :, :]).reshape(BS, D),
                    'ln2_g', 'ln2_b')

  # ---- position-wise FFN (all B*S rows)
  h1 = jnp.maximum(dense(out2, 'w1', 'b1'), 0.0)   # (B*S, dff)
  ffn = jnp.dot(bf16(h1), w('w2'),
                preferred_element_type=jnp.float32) + b('b2')
  out_ref[...] = layer_norm(ffn + out2, 'ln3_g', 'ln3_b')


# --------------------------- one-time parameter packing ---------------------------

def pack_decoder_layer_params(params, num_heads):
  """Pack all weights into one bf16 slab and all bias/LN vectors into one f32 slab."""
  D = params['mha1']['wq'].shape[0]
  dff = params['w1'].shape[1]
  dp = D // num_heads
  scale = 1.0 / math.sqrt(dp)                      # fold 1/sqrt(depth) into Q proj
  m1, m2 = params['mha1'], params['mha2']

  weights = {
      'wqkv1': jnp.concatenate([m1['wq'] * scale, m1['wk'], m1['wv']], axis=1),
      'wo1': m1['wo'],
      'wqk2': jnp.concatenate([m2['wq'] * scale, m2['wk']], axis=1),
      'wv2': m2['wv'],
      'wo2': m2['wo'],
      'w1': params['w1'],
      'w2': params['w2'],
  }
  biases = {
      'bqkv1': jnp.concatenate([m1['bq'] * scale, m1['bk'], m1['bv']]),
      'bo1': m1['bo'],
      'bqk2': jnp.concatenate([m2['bq'] * scale, m2['bk']]),
      'bv2': m2['bv'],
      'bo2': m2['bo'],
      'b1': params['b1'],
      'b2': params['b2'],
      'ln1_g': params['ln1_g'], 'ln1_b': params['ln1_b'],
      'ln2_g': params['ln2_g'], 'ln2_b': params['ln2_b'],
      'ln3_g': params['ln3_g'], 'ln3_b': params['ln3_b'],
  }

  w_layout, w_rows, w_cols = _weight_layout(D, dff)
  w_slab = jnp.zeros((w_rows, w_cols), jnp.float32)
  for name, (r, rows, cols) in w_layout.items():
    w_slab = w_slab.at[r:r + rows, 0:cols].set(weights[name])

  b_layout, b_rows, b_cols = _bias_layout(D, dff)
  b_slab = jnp.zeros((b_rows, b_cols), jnp.float32)
  for name, (i, width) in b_layout.items():
    b_slab = b_slab.at[i, 0:width].set(biases[name])

  # bf16 is the native MXU dtype on v5e/v6e/v7x and halves the weight DMA bytes.
  return {'w': w_slab.astype(jnp.bfloat16), 'b': b_slab}


# --------------------------------- fused forward ---------------------------------

@functools.partial(jax.jit, static_argnames=('num_heads',))
def decoder_layer_forward(packed, x, enc_output, look_ahead_mask, padding_mask,
                          num_heads):
  """Fused DecoderLayer forward.  x, enc_output: (B, S, D) f32."""
  B, S, D = x.shape
  assert B == 2, 'tuple-unpacking quirk in the PyTorch reference requires batch == 2'
  assert enc_output.shape == (B, S, D)
  assert D % num_heads == 0
  assert S <= D, 'mask rows are packed into the D-wide activation slab'

  w_slab, b_slab = packed['w'], packed['b']
  dff = w_slab.shape[0] - 6 * D
  assert dff > 0

  # Additive masks for batch 0 only (only out[0] of each MHA is consumed).
  la0 = look_ahead_mask.reshape(B, S, S)[0].astype(jnp.float32) * _MASK_SCALE
  pad0 = padding_mask.reshape(B, S)[0:1].astype(jnp.float32) * _MASK_SCALE
  mask_rows = jnp.pad(jnp.concatenate([la0, pad0], axis=0),
                      ((0, 0), (0, D - S)))
  act_slab = jnp.concatenate(
      [x.reshape(B * S, D), enc_output[0], mask_rows], axis=0)   # (B*S+2S+1, D)

  kernel = functools.partial(_decoder_layer_kernel, batch=B, seq=S, d_model=D,
                             num_heads=num_heads, dff=dff, eps=_LN_EPS)

  flops = 16 * S * D * D + 8 * S * S * D + 4 * B * S * D * dff
  transcendentals = 2 * num_heads * S * S + 3 * B * S
  bytes_accessed = (act_slab.size * 4 + w_slab.size * 2 + b_slab.size * 4
                    + B * S * D * 4)

  out2d = pl.pallas_call(
      kernel,
      out_shape=jax.ShapeDtypeStruct((B * S, D), jnp.float32),
      grid=(1,),
      in_specs=[pl.BlockSpec(act_slab.shape, lambda i: (0, 0)),
                pl.BlockSpec(w_slab.shape, lambda i: (0, 0)),
                pl.BlockSpec(b_slab.shape, lambda i: (0, 0))],
      out_specs=pl.BlockSpec((B * S, D), lambda i: (0, 0)),
      compiler_params=pltpu.CompilerParams(
          dimension_semantics=("arbitrary",)),
      cost_estimate=pl.CostEstimate(flops=flops,
                                    transcendentals=transcendentals,
                                    bytes_accessed=bytes_accessed),
  )(act_slab, w_slab, b_slab)
  return out2d.reshape(B, S, D)


# ------------------------------- masks (JAX) -------------------------------

def create_padding_mask(x):
  mask = (x == 0).astype(jnp.float32)
  return mask[:, None, None, :]                    # (B, 1, 1, S)


def create_look_ahead_mask(x):
  seq_len = x.shape[1]
  la = jnp.triu(jnp.ones((seq_len, seq_len), jnp.float32), k=1)[None, None]
  pad = create_padding_mask(x)
  return jnp.maximum(la, pad)                      # (B, 1, S, S)


# ----------------------------- parameter init -------------------------------

def init_linear(key, fan_in, fan_out):
  k1, k2 = jax.random.split(key)
  bound = 1.0 / math.sqrt(fan_in)
  w = jax.random.uniform(k1, (fan_in, fan_out), jnp.float32, -bound, bound)
  b = jax.random.uniform(k2, (fan_out,), jnp.float32, -bound, bound)
  return w, b


def init_mha(key, d_model):
  ks = jax.random.split(key, 4)
  p = {}
  p['wq'], p['bq'] = init_linear(ks[0], d_model, d_model)
  p['wk'], p['bk'] = init_linear(ks[1], d_model, d_model)
  p['wv'], p['bv'] = init_linear(ks[2], d_model, d_model)
  p['wo'], p['bo'] = init_linear(ks[3], d_model, d_model)
  return p


def init_decoder_layer(key, d_model, dff):
  ks = jax.random.split(key, 4)
  p = {'mha1': init_mha(ks[0], d_model), 'mha2': init_mha(ks[1], d_model)}
  p['w1'], p['b1'] = init_linear(ks[2], d_model, dff)
  p['w2'], p['b2'] = init_linear(ks[3], dff, d_model)
  for n in ('ln1', 'ln2', 'ln3'):
    p[n + '_g'] = jnp.ones((d_model,), jnp.float32)
    p[n + '_b'] = jnp.zeros((d_model,), jnp.float32)
  return p


# -------------------------- pure-JAX f32 reference --------------------------

def _mha_ref(p, query, key, value, mask, num_heads):
  B, Sq, D = query.shape
  dp = D // num_heads

  def split(t):
    return t.reshape(B, -1, num_heads, dp).transpose(0, 2, 1, 3)

  q = split(jnp.dot(query, p['wq'], precision=_HI) + p['bq'])
  k = split(jnp.dot(key, p['wk'], precision=_HI) + p['bk'])
  v = split(jnp.dot(value, p['wv'], precision=_HI) + p['bv'])
  logits = jnp.einsum('bhqd,bhkd->bhqk', q, k,
                      precision=_HI) / jnp.sqrt(jnp.float32(dp))
  logits = logits + mask * _MASK_SCALE
  w = jax.nn.softmax(logits, axis=-1)
  o = jnp.einsum('bhqk,bhkd->bhqd', w, v, precision=_HI)
  o = o.transpose(0, 2, 1, 3).reshape(B, Sq, D)
  return jnp.dot(o, p['wo'], precision=_HI) + p['bo']


def _decoder_layer_ref(p, x, enc, la_mask, pad_mask, num_heads):
  def ln(t, g, b):
    m = t.mean(-1, keepdims=True)
    v = ((t - m) ** 2).mean(-1, keepdims=True)
    return (t - m) / jnp.sqrt(v + _LN_EPS) * g + b

  mha1 = _mha_ref(p['mha1'], x, x, x, la_mask, num_heads)
  attn1 = mha1[0]                                  # tuple-unpack quirk
  out1 = ln(attn1 + x, p['ln1_g'], p['ln1_b'])
  mha2 = _mha_ref(p['mha2'], enc, enc, out1, pad_mask, num_heads)
  attn2 = mha2[0]
  out2 = ln(attn2 + out1, p['ln2_g'], p['ln2_b'])
  h = jnp.maximum(jnp.dot(out2, p['w1'], precision=_HI) + p['b1'], 0.0)
  ffn = jnp.dot(h, p['w2'], precision=_HI) + p['b2']
  return ln(ffn + out2, p['ln3_g'], p['ln3_b'])


# ---------------------------------- main -------------------------------------

if __name__ == "__main__":
  d_model, num_heads, dff = 32, 4, 64
  B, S = 2, 8

  root = jax.random.PRNGKey(0)
  kp, kx, ke, ki, kt = jax.random.split(root, 5)
  params = init_decoder_layer(kp, d_model, dff)
  packed = pack_decoder_layer_params(params, num_heads)   # one-time packing

  x = jax.random.normal(kx, (B, S, d_model), jnp.float32)
  enc_output = jax.random.normal(ke, (B, S, d_model), jnp.float32)

  inp_tokens = jax.random.randint(ki, (B, S), 1, 16, dtype=jnp.int32)
  inp_tokens = inp_tokens.at[:, -2:].set(0)               # encoder padding tokens
  tar_tokens = jax.random.randint(kt, (B, S), 1, 16, dtype=jnp.int32)
  tar_tokens = tar_tokens.at[:, -1:].set(0)               # decoder padding token

  look_ahead_mask = create_look_ahead_mask(tar_tokens)    # (B, 1, S, S)
  padding_mask = create_padding_mask(inp_tokens)          # (B, 1, 1, S)

  out = decoder_layer_forward(packed, x, enc_output, look_ahead_mask,
                              padding_mask, num_heads=num_heads)
  out = jax.block_until_ready(out)

  assert out.shape == (B, S, d_model), out.shape
  assert bool(jnp.all(jnp.isfinite(out)))

  ref = jax.block_until_ready(
      _decoder_layer_ref(params, x, enc_output, look_ahead_mask,
                         padding_mask, num_heads))
  max_err = float(jnp.max(jnp.abs(out - ref)))
  # Kernel uses bf16 MXU operands with f32 accumulation; reference is full f32.
  assert max_err < 5e-2, f"max abs error vs reference: {max_err}"

  print("KERNEL_OK")
</pallas_src>

<mosaic_0001>
module attributes {stable_mosaic.version = 11 : i64} {
  func.func @_decoder_layer_kernel(%arg0: i32, %arg1: memref<33x32xf32, #tpu.memory_space<vmem>>, %arg2: memref<256x96xbf16, #tpu.memory_space<vmem>>, %arg3: memref<13x96xf32, #tpu.memory_space<vmem>>, %arg4: memref<16x32xf32, #tpu.memory_space<vmem>>) attributes {dimension_semantics = [#tpu.dimension_semantics<arbitrary>], iteration_bounds = array<i64: 1>, scalar_prefetch = 0 : i64, scratch_operands = 0 : i64, tpu.core_type = #tpu.core_type<tc>, window_params = [{pipeline_mode = #tpu.pipeline_mode<synchronous>, transform_indices = @transform_0, window_bounds = array<i64: 33, 32>}, {pipeline_mode = #tpu.pipeline_mode<synchronous>, transform_indices = @transform_1, window_bounds = array<i64: 256, 96>}, {pipeline_mode = #tpu.pipeline_mode<synchronous>, transform_indices = @transform_2, window_bounds = array<i64: 13, 96>}, {pipeline_mode = #tpu.pipeline_mode<synchronous>, transform_indices = @transform_3, window_bounds = array<i64: 16, 32>}]} {
    %c0 = arith.constant 0 : index
    %c0_0 = arith.constant 0 : index
    %0 = vector.load %arg1[%c0, %c0_0] : memref<33x32xf32, #tpu.memory_space<vmem>>, vector<16x32xf32>
    %c16 = arith.constant 16 : index
    %c0_1 = arith.constant 0 : index
    %1 = vector.load %arg1[%c16, %c0_1] : memref<33x32xf32, #tpu.memory_space<vmem>>, vector<8x32xf32>
    %c24 = arith.constant 24 : index
    %c0_2 = arith.constant 0 : index
    %2 = vector.load %arg1[%c24, %c0_2] : memref<33x32xf32, #tpu.memory_space<vmem>>, vector<8x8xf32>
    %c32 = arith.constant 32 : index
    %c0_3 = arith.constant 0 : index
    %3 = vector.load %arg1[%c32, %c0_3] : memref<33x32xf32, #tpu.memory_space<vmem>>, vector<1x8xf32>
    %4 = vector.extract_strided_slice %0 {offsets = [0, 0], sizes = [8, 32], strides = [1, 1]} : vector<16x32xf32> to vector<8x32xf32>
    %5 = arith.truncf %4 : vector<8x32xf32> to vector<8x32xbf16>
    %c0_4 = arith.constant 0 : index
    %c0_5 = arith.constant 0 : index
    %6 = vector.load %arg2[%c0_4, %c0_5] : memref<256x96xbf16, #tpu.memory_space<vmem>>, vector<32x96xbf16>
    %cst = arith.constant dense<0.000000e+00> : vector<8x96xf32>
    %7 = tpu.matmul %5, %6, %cst {dimension_numbers = #tpu.dot_dimension_numbers<[1], [0], [0], [1], [0, 0, 1, 1], [], []>} : vector<8x32xbf16>, vector<32x96xbf16>, vector<8x96xf32> -> vector<8x96xf32>
    %c0_6 = arith.constant 0 : index
    %c0_7 = arith.constant 0 : index
    %8 = vector.load %arg3[%c0_6, %c0_7] : memref<13x96xf32, #tpu.memory_space<vmem>>, vector<1x96xf32>
    %9 = vector.broadcast %8 : vector<1x96xf32> to vector<8x96xf32>
    %10 = arith.addf %7, %9 : vector<8x96xf32>
    %11 = vector.extract_strided_slice %10 {offsets = [0, 0], sizes = [8, 32], strides = [1, 1]} : vector<8x96xf32> to vector<8x32xf32>
    %12 = vector.extract_strided_slice %10 {offsets = [0, 32], sizes = [8, 32], strides = [1, 1]} : vector<8x96xf32> to vector<8x32xf32>
    %13 = vector.extract_strided_slice %10 {offsets = [0, 64], sizes = [8, 32], strides = [1, 1]} : vector<8x96xf32> to vector<8x32xf32>
    %14 = vector.shape_cast %2 : vector<8x8xf32> to vector<1x8x8xf32>
    %15 = vector.shape_cast %11 : vector<8x32xf32> to vector<8x4x8xf32>
    %16 = tpu.transpose %15, [1, 0, 2] : vector<8x4x8xf32> -> vector<4x8x8xf32>
    %17 = vector.shape_cast %12 : vector<8x32xf32> to vector<8x4x8xf32>
    %18 = tpu.transpose %17, [1, 0, 2] : vector<8x4x8xf32> -> vector<4x8x8xf32>
    %19 = vector.shape_cast %13 : vector<8x32xf32> to vector<8x4x8xf32>
    %20 = tpu.transpose %19, [1, 0, 2] : vector<8x4x8xf32> -> vector<4x8x8xf32>
    %21 = arith.truncf %16 : vector<4x8x8xf32> to vector<4x8x8xbf16>
    %22 = arith.truncf %18 : vector<4x8x8xf32> to vector<4x8x8xbf16>
    "tpu.trace_start"() <{level = 10 : i32, message = "hqd,hkd->hqk"}> : () -> ()
    %cst_8 = arith.constant dense<0.000000e+00> : vector<4x8x8xf32>
    %23 = tpu.matmul %21, %22, %cst_8 {dimension_numbers = #tpu.dot_dimension_numbers<[2], [2], [1], [1], [0, 0, 0, 1, 1, 1], [0], [0]>} : vector<4x8x8xbf16>, vector<4x8x8xbf16>, vector<4x8x8xf32> -> vector<4x8x8xf32>
    "tpu.trace_stop"() : () -> ()
    %24 = vector.broadcast %14 : vector<1x8x8xf32> to vector<4x8x8xf32>
    %25 = arith.addf %23, %24 : vector<4x8x8xf32>
    %cst_9 = arith.constant dense<0xFF800000> : vector<4x8xf32>
    %26 = vector.multi_reduction <maximumf>, %25, %cst_9 [2] : vector<4x8x8xf32> to vector<4x8xf32>
    %27 = vector.shape_cast %26 : vector<4x8xf32> to vector<4x8x1xf32>
    %28 = vector.broadcast %27 : vector<4x8x1xf32> to vector<4x8x8xf32>
    %29 = arith.subf %25, %28 : vector<4x8x8xf32>
    %30 = math.exp %29 : vector<4x8x8xf32>
    %cst_10 = arith.constant dense<0.000000e+00> : vector<4x8xf32>
    %31 = vector.multi_reduction <add>, %30, %cst_10 [2] : vector<4x8x8xf32> to vector<4x8xf32>
    %32 = vector.shape_cast %31 : vector<4x8xf32> to vector<4x8x1xf32>
    %33 = tpu.reciprocal %32 : vector<4x8x1xf32> -> vector<4x8x1xf32>
    %34 = vector.broadcast %33 : vector<4x8x1xf32> to vector<4x8x8xf32>
    %35 = arith.mulf %30, %34 : vector<4x8x8xf32>
    %36 = arith.truncf %35 : vector<4x8x8xf32> to vector<4x8x8xbf16>
    %37 = arith.truncf %20 : vector<4x8x8xf32> to vector<4x8x8xbf16>
    "tpu.trace_start"() <{level = 10 : i32, message = "hqk,hkd->hqd"}> : () -> ()
    %cst_11 = arith.constant dense<0.000000e+00> : vector<4x8x8xf32>
    %38 = tpu.matmul %36, %37, %cst_11 {dimension_numbers = #tpu.dot_dimension_numbers<[2], [1], [1], [2], [0, 0, 0, 1, 1, 2], [0], [0]>} : vector<4x8x8xbf16>, vector<4x8x8xbf16>, vector<4x8x8xf32> -> vector<4x8x8xf32>
    "tpu.trace_stop"() : () -> ()
    %39 = tpu.transpose %38, [1, 0, 2] : vector<4x8x8xf32> -> vector<8x4x8xf32>
    %40 = vector.shape_cast %39 : vector<8x4x8xf32> to vector<8x32xf32>
    %41 = arith.truncf %40 : vector<8x32xf32> to vector<8x32xbf16>
    %c32_12 = arith.constant 32 : index
    %c0_13 = arith.constant 0 : index
    %42 = vector.load %arg2[%c32_12, %c0_13] : memref<256x96xbf16, #tpu.memory_space<vmem>>, vector<32x32xbf16>
    %cst_14 = arith.constant dense<0.000000e+00> : vector<8x32xf32>
    %43 = tpu.matmul %41, %42, %cst_14 {dimension_numbers = #tpu.dot_dimension_numbers<[1], [0], [0], [1], [0, 0, 1, 1], [], []>} : vector<8x32xbf16>, vector<32x32xbf16>, vector<8x32xf32> -> vector<8x32xf32>
    %c1 = arith.constant 1 : index
    %c0_15 = arith.constant 0 : index
    %44 = vector.load %arg3[%c1, %c0_15] : memref<13x96xf32, #tpu.memory_space<vmem>>, vector<1x32xf32>
    %45 = vector.broadcast %44 : vector<1x32xf32> to vector<8x32xf32>
    %46 = arith.addf %43, %45 : vector<8x32xf32>
    %47 = vector.shape_cast %0 : vector<16x32xf32> to vector<2x8x32xf32>
    %48 = vector.shape_cast %46 : vector<8x32xf32> to vector<1x8x32xf32>
    %49 = vector.broadcast %48 : vector<1x8x32xf32> to vector<2x8x32xf32>
    %50 = arith.addf %47, %49 : vector<2x8x32xf32>
    %51 = vector.shape_cast %50 : vector<2x8x32xf32> to vector<16x32xf32>
    %cst_16 = arith.constant dense<0.000000e+00> : vector<16xf32>
    %52 = vector.multi_reduction <add>, %51, %cst_16 [1] : vector<16x32xf32> to vector<16xf32>
    %53 = vector.shape_cast %52 : vector<16xf32> to vector<16x1xf32>
    %cst_17 = arith.constant 3.200000e+01 : f32
    %54 = vector.broadcast %cst_17 : f32 to vector<16x1xf32>
    %55 = arith.divf %53, %54 : vector<16x1xf32>
    %56 = vector.broadcast %55 : vector<16x1xf32> to vector<16x32xf32>
    %57 = arith.subf %51, %56 : vector<16x32xf32>
    %58 = arith.mulf %57, %57 : vector<16x32xf32>
    %cst_18 = arith.constant dense<0.000000e+00> : vector<16xf32>
    %59 = vector.multi_reduction <add>, %58, %cst_18 [1] : vector<16x32xf32> to vector<16xf32>
    %60 = vector.shape_cast %59 : vector<16xf32> to vector<16x1xf32>
    %cst_19 = arith.constant 3.200000e+01 : f32
    %61 = vector.broadcast %cst_19 : f32 to vector<16x1xf32>
    %62 = arith.divf %60, %61 : vector<16x1xf32>
    %cst_20 = arith.constant 9.99999997E-7 : f32
    %63 = vector.broadcast %cst_20 : f32 to vector<16x1xf32>
    %64 = arith.addf %62, %63 : vector<16x1xf32>
    %65 = math.rsqrt %64 : vector<16x1xf32>
    %66 = vector.broadcast %65 : vector<16x1xf32> to vector<16x32xf32>
    %67 = arith.mulf %57, %66 : vector<16x32xf32>
    %c7 = arith.constant 7 : index
    %c0_21 = arith.constant 0 : index
    %68 = vector.load %arg3[%c7, %c0_21] : memref<13x96xf32, #tpu.memory_space<vmem>>, vector<1x32xf32>
    %69 = vector.broadcast %68 : vector<1x32xf32> to vector<16x32xf32>
    %70 = arith.mulf %67, %69 : vector<16x32xf32>
    %c8 = arith.constant 8 : index
    %c0_22 = arith.constant 0 : index
    %71 = vector.load %arg3[%c8, %c0_22] : memref<13x96xf32, #tpu.memory_space<vmem>>, vector<1x32xf32>
    %72 = vector.broadcast %71 : vector<1x32xf32> to vector<16x32xf32>
    %73 = arith.addf %70, %72 : vector<16x32xf32>
    %74 = arith.truncf %1 : vector<8x32xf32> to vector<8x32xbf16>
    %c64 = arith.constant 64 : index
    %c0_23 = arith.constant 0 : index
    %75 = vector.load %arg2[%c64, %c0_23] : memref<256x96xbf16, #tpu.memory_space<vmem>>, vector<32x64xbf16>
    %cst_24 = arith.constant dense<0.000000e+00> : vector<8x64xf32>
    %76 = tpu.matmul %74, %75, %cst_24 {dimension_numbers = #tpu.dot_dimension_numbers<[1], [0], [0], [1], [0, 0, 1, 1], [], []>} : vector<8x32xbf16>, vector<32x64xbf16>, vector<8x64xf32> -> vector<8x64xf32>
    %c2 = arith.constant 2 : index
    %c0_25 = arith.constant 0 : index
    %77 = vector.load %arg3[%c2, %c0_25] : memref<13x96xf32, #tpu.memory_space<vmem>>, vector<1x64xf32>
    %78 = vector.broadcast %77 : vector<1x64xf32> to vector<8x64xf32>
    %79 = arith.addf %76, %78 : vector<8x64xf32>
    %80 = vector.extract_strided_slice %73 {offsets = [0, 0], sizes = [8, 32], strides = [1, 1]} : vector<16x32xf32> to vector<8x32xf32>
    %81 = arith.truncf %80 : vector<8x32xf32> to vector<8x32xbf16>
    %c96 = arith.constant 96 : index
    %c0_26 = arith.constant 0 : index
    %82 = vector.load %arg2[%c96, %c0_26] : memref<256x96xbf16, #tpu.memory_space<vmem>>, vector<32x32xbf16>
    %cst_27 = arith.constant dense<0.000000e+00> : vector<8x32xf32>
    %83 = tpu.matmul %81, %82, %cst_27 {dimension_numbers = #tpu.dot_dimension_numbers<[1], [0], [0], [1], [0, 0, 1, 1], [], []>} : vector<8x32xbf16>, vector<32x32xbf16>, vector<8x32xf32> -> vector<8x32xf32>
    %c3 = arith.constant 3 : index
    %c0_28 = arith.constant 0 : index
    %84 = vector.load %arg3[%c3, %c0_28] : memref<13x96xf32, #tpu.memory_space<vmem>>, vector<1x32xf32>
    %85 = vector.broadcast %84 : vector<1x32xf32> to vector<8x32xf32>
    %86 = arith.addf %83, %85 : vector<8x32xf32>
    %87 = vector.extract_strided_slice %79 {offsets = [0, 0], sizes = [8, 32], strides = [1, 1]} : vector<8x64xf32> to vector<8x32xf32>
    %88 = vector.extract_strided_slice %79 {offsets = [0, 32], sizes = [8, 32], strides = [1, 1]} : vector<8x64xf32> to vector<8x32xf32>
    %89 = vector.shape_cast %3 : vector<1x8xf32> to vector<1x1x8xf32>
    %90 = vector.shape_cast %87 : vector<8x32xf32> to vector<8x4x8xf32>
    %91 = tpu.transpose %90, [1, 0, 2] : vector<8x4x8xf32> -> vector<4x8x8xf32>
    %92 = vector.shape_cast %88 : vector<8x32xf32> to vector<8x4x8xf32>
    %93 = tpu.transpose %92, [1, 0, 2] : vector<8x4x8xf32> -> vector<4x8x8xf32>
    %94 = vector.shape_cast %86 : vector<8x32xf32> to vector<8x4x8xf32>
    %95 = tpu.transpose %94, [1, 0, 2] : vector<8x4x8xf32> -> vector<4x8x8xf32>
    %96 = arith.truncf %91 : vector<4x8x8xf32> to vector<4x8x8xbf16>
    %97 = arith.truncf %93 : vector<4x8x8xf32> to vector<4x8x8xbf16>
    "tpu.trace_start"() <{level = 10 : i32, message = "hqd,hkd->hqk"}> : () -> ()
    %cst_29 = arith.constant dense<0.000000e+00> : vector<4x8x8xf32>
    %98 = tpu.matmul %96, %97, %cst_29 {dimension_numbers = #tpu.dot_dimension_numbers<[2], [2], [1], [1], [0, 0, 0, 1, 1, 1], [0], [0]>} : vector<4x8x8xbf16>, vector<4x8x8xbf16>, vector<4x8x8xf32> -> vector<4x8x8xf32>
    "tpu.trace_stop"() : () -> ()
    %99 = vector.broadcast %89 : vector<1x1x8xf32> to vector<4x8x8xf32>
    %100 = arith.addf %98, %99 : vector<4x8x8xf32>
    %cst_30 = arith.constant dense<0xFF800000> : vector<4x8xf32>
    %101 = vector.multi_reduction <maximumf>, %100, %cst_30 [2] : vector<4x8x8xf32> to vector<4x8xf32>
    %102 = vector.shape_cast %101 : vector<4x8xf32> to vector<4x8x1xf32>
    %103 = vector.broadcast %102 : vector<4x8x1xf32> to vector<4x8x8xf32>
    %104 = arith.subf %100, %103 : vector<4x8x8xf32>
    %105 = math.exp %104 : vector<4x8x8xf32>
    %cst_31 = arith.constant dense<0.000000e+00> : vector<4x8xf32>
    %106 = vector.multi_reduction <add>, %105, %cst_31 [2] : vector<4x8x8xf32> to vector<4x8xf32>
    %107 = vector.shape_cast %106 : vector<4x8xf32> to vector<4x8x1xf32>
    %108 = tpu.reciprocal %107 : vector<4x8x1xf32> -> vector<4x8x1xf32>
    %109 = vector.broadcast %108 : vector<4x8x1xf32> to vector<4x8x8xf32>
    %110 = arith.mulf %105, %109 : vector<4x8x8xf32>
    %111 = arith.truncf %110 : vector<4x8x8xf32> to vector<4x8x8xbf16>
    %112 = arith.truncf %95 : vector<4x8x8xf32> to vector<4x8x8xbf16>
    "tpu.trace_start"() <{level = 10 : i32, message = "hqk,hkd->hqd"}> : () -> ()
    %cst_32 = arith.constant dense<0.000000e+00> : vector<4x8x8xf32>
    %113 = tpu.matmul %111, %112, %cst_32 {dimension_numbers = #tpu.dot_dimension_numbers<[2], [1], [1], [2], [0, 0, 0, 1, 1, 2], [0], [0]>} : vector<4x8x8xbf16>, vector<4x8x8xbf16>, vector<4x8x8xf32> -> vector<4x8x8xf32>
    "tpu.trace_stop"() : () -> ()
    %114 = tpu.transpose %113, [1, 0, 2] : vector<4x8x8xf32> -> vector<8x4x8xf32>
    %115 = vector.shape_cast %114 : vector<8x4x8xf32> to vector<8x32xf32>
    %116 = arith.truncf %115 : vector<8x32xf32> to vector<8x32xbf16>
    %c128 = arith.constant 128 : index
    %c0_33 = arith.constant 0 : index
    %117 = vector.load %arg2[%c128, %c0_33] : memref<256x96xbf16, #tpu.memory_space<vmem>>, vector<32x32xbf16>
    %cst_34 = arith.constant dense<0.000000e+00> : vector<8x32xf32>
    %118 = tpu.matmul %116, %117, %cst_34 {dimension_numbers = #tpu.dot_dimension_numbers<[1], [0], [0], [1], [0, 0, 1, 1], [], []>} : vector<8x32xbf16>, vector<32x32xbf16>, vector<8x32xf32> -> vector<8x32xf32>
    %c4 = arith.constant 4 : index
    %c0_35 = arith.constant 0 : index
    %119 = vector.load %arg3[%c4, %c0_35] : memref<13x96xf32, #tpu.memory_space<vmem>>, vector<1x32xf32>
    %120 = vector.broadcast %119 : vector<1x32xf32> to vector<8x32xf32>
    %121 = arith.addf %118, %120 : vector<8x32xf32>
    %122 = vector.shape_cast %73 : vector<16x32xf32> to vector<2x8x32xf32>
    %123 = vector.shape_cast %121 : vector<8x32xf32> to vector<1x8x32xf32>
    %124 = vector.broadcast %123 : vector<1x8x32xf32> to vector<2x8x32xf32>
    %125 = arith.addf %122, %124 : vector<2x8x32xf32>
    %126 = vector.shape_cast %125 : vector<2x8x32xf32> to vector<16x32xf32>
    %cst_36 = arith.constant dense<0.000000e+00> : vector<16xf32>
    %127 = vector.multi_reduction <add>, %126, %cst_36 [1] : vector<16x32xf32> to vector<16xf32>
    %128 = vector.shape_cast %127 : vector<16xf32> to vector<16x1xf32>
    %cst_37 = arith.constant 3.200000e+01 : f32
    %129 = vector.broadcast %cst_37 : f32 to vector<16x1xf32>
    %130 = arith.divf %128, %129 : vector<16x1xf32>
    %131 = vector.broadcast %130 : vector<16x1xf32> to vector<16x32xf32>
    %132 = arith.subf %126, %131 : vector<16x32xf32>
    %133 = arith.mulf %132, %132 : vector<16x32xf32>
    %cst_38 = arith.constant dense<0.000000e+00> : vector<16xf32>
    %134 = vector.multi_reduction <add>, %133, %cst_38 [1] : vector<16x32xf32> to vector<16xf32>
    %135 = vector.shape_cast %134 : vector<16xf32> to vector<16x1xf32>
    %cst_39 = arith.constant 3.200000e+01 : f32
    %136 = vector.broadcast %cst_39 : f32 to vector<16x1xf32>
    %137 = arith.divf %135, %136 : vector<16x1xf32>
    %cst_40 = arith.constant 9.99999997E-7 : f32
    %138 = vector.broadcast %cst_40 : f32 to vector<16x1xf32>
    %139 = arith.addf %137, %138 : vector<16x1xf32>
    %140 = math.rsqrt %139 : vector<16x1xf32>
    %141 = vector.broadcast %140 : vector<16x1xf32> to vector<16x32xf32>
    %142 = arith.mulf %132, %141 : vector<16x32xf32>
    %c9 = arith.constant 9 : index
    %c0_41 = arith.constant 0 : index
    %143 = vector.load %arg3[%c9, %c0_41] : memref<13x96xf32, #tpu.memory_space<vmem>>, vector<1x32xf32>
    %144 = vector.broadcast %143 : vector<1x32xf32> to vector<16x32xf32>
    %145 = arith.mulf %142, %144 : vector<16x32xf32>
    %c10 = arith.constant 10 : index
    %c0_42 = arith.constant 0 : index
    %146 = vector.load %arg3[%c10, %c0_42] : memref<13x96xf32, #tpu.memory_space<vmem>>, vector<1x32xf32>
    %147 = vector.broadcast %146 : vector<1x32xf32> to vector<16x32xf32>
    %148 = arith.addf %145, %147 : vector<16x32xf32>
    %149 = arith.truncf %148 : vector<16x32xf32> to vector<16x32xbf16>
    %c160 = arith.constant 160 : index
    %c0_43 = arith.constant 0 : index
    %150 = vector.load %arg2[%c160, %c0_43] : memref<256x96xbf16, #tpu.memory_space<vmem>>, vector<32x64xbf16>
    %cst_44 = arith.constant dense<0.000000e+00> : vector<16x64xf32>
    %151 = tpu.matmul %149, %150, %cst_44 {dimension_numbers = #tpu.dot_dimension_numbers<[1], [0], [0], [1], [0, 0, 1, 1], [], []>} : vector<16x32xbf16>, vector<32x64xbf16>, vector<16x64xf32> -> vector<16x64xf32>
    %c5 = arith.constant 5 : index
    %c0_45 = arith.constant 0 : index
    %152 = vector.load %arg3[%c5, %c0_45] : memref<13x96xf32, #tpu.memory_space<vmem>>, vector<1x64xf32>
    %153 = vector.broadcast %152 : vector<1x64xf32> to vector<16x64xf32>
    %154 = arith.addf %151, %153 : vector<16x64xf32>
    %cst_46 = arith.constant 0.000000e+00 : f32
    %155 = vector.broadcast %cst_46 : f32 to vector<16x64xf32>
    %156 = arith.maximumf %154, %155 : vector<16x64xf32>
    %157 = arith.truncf %156 : vector<16x64xf32> to vector<16x64xbf16>
    %c192 = arith.constant 192 : index
    %c0_47 = arith.constant 0 : index
    %158 = vector.load %arg2[%c192, %c0_47] : memref<256x96xbf16, #tpu.memory_space<vmem>>, vector<64x32xbf16>
    %cst_48 = arith.constant dense<0.000000e+00> : vector<16x32xf32>
    %159 = tpu.matmul %157, %158, %cst_48 {dimension_numbers = #tpu.dot_dimension_numbers<[1], [0], [0], [1], [0, 0, 1, 1], [], []>} : vector<16x64xbf16>, vector<64x32xbf16>, vector<16x32xf32> -> vector<16x32xf32>
    %c6 = arith.constant 6 : index
    %c0_49 = arith.constant 0 : index
    %160 = vector.load %arg3[%c6, %c0_49] : memref<13x96xf32, #tpu.memory_space<vmem>>, vector<1x32xf32>
    %161 = vector.broadcast %160 : vector<1x32xf32> to vector<16x32xf32>
    %162 = arith.addf %159, %161 : vector<16x32xf32>
    %163 = arith.addf %162, %148 : vector<16x32xf32>
    %cst_50 = arith.constant dense<0.000000e+00> : vector<16xf32>
    %164 = vector.multi_reduction <add>, %163, %cst_50 [1] : vector<16x32xf32> to vector<16xf32>
    %165 = vector.shape_cast %164 : vector<16xf32> to vector<16x1xf32>
    %cst_51 = arith.constant 3.200000e+01 : f32
    %166 = vector.broadcast %cst_51 : f32 to vector<16x1xf32>
    %167 = arith.divf %165, %166 : vector<16x1xf32>
    %168 = vector.broadcast %167 : vector<16x1xf32> to vector<16x32xf32>
    %169 = arith.subf %163, %168 : vector<16x32xf32>
    %170 = arith.mulf %169, %169 : vector<16x32xf32>
    %cst_52 = arith.constant dense<0.000000e+00> : vector<16xf32>
    %171 = vector.multi_reduction <add>, %170, %cst_52 [1] : vector<16x32xf32> to vector<16xf32>
    %172 = vector.shape_cast %171 : vector<16xf32> to vector<16x1xf32>
    %cst_53 = arith.constant 3.200000e+01 : f32
    %173 = vector.broadcast %cst_53 : f32 to vector<16x1xf32>
    %174 = arith.divf %172, %173 : vector<16x1xf32>
    %cst_54 = arith.constant 9.99999997E-7 : f32
    %175 = vector.broadcast %cst_54 : f32 to vector<16x1xf32>
    %176 = arith.addf %174, %175 : vector<16x1xf32>
    %177 = math.rsqrt %176 : vector<16x1xf32>
    %178 = vector.broadcast %177 : vector<16x1xf32> to vector<16x32xf32>
    %179 = arith.mulf %169, %178 : vector<16x32xf32>
    %c11 = arith.constant 11 : index
    %c0_55 = arith.constant 0 : index
    %180 = vector.load %arg3[%c11, %c0_55] : memref<13x96xf32, #tpu.memory_space<vmem>>, vector<1x32xf32>
    %181 = vector.broadcast %180 : vector<1x32xf32> to vector<16x32xf32>
    %182 = arith.mulf %179, %181 : vector<16x32xf32>
    %c12 = arith.constant 12 : index
    %c0_56 = arith.constant 0 : index
    %183 = vector.load %arg3[%c12, %c0_56] : memref<13x96xf32, #tpu.memory_space<vmem>>, vector<1x32xf32>
    %184 = vector.broadcast %183 : vector<1x32xf32> to vector<16x32xf32>
    %185 = arith.addf %182, %184 : vector<16x32xf32>
    %c0_57 = arith.constant 0 : index
    %c0_58 = arith.constant 0 : index
    %186 = vector.load %arg4[%c0_57, %c0_58] : memref<16x32xf32, #tpu.memory_space<vmem>>, vector<16x32xf32>
    tpu.vector_store %arg4[%c0_57, %c0_58], %185 {strides = array<i32>} : memref<16x32xf32, #tpu.memory_space<vmem>>, vector<16x32xf32>,
    return
  }
  func.func @transform_0(%arg0: i32) -> (i32, i32) {
    %c0_i32 = arith.constant 0 : i32
    %c0_i32_0 = arith.constant 0 : i32
    %c0_i32_1 = arith.constant 0 : i32
    return %c0_i32, %c0_i32_0 : i32, i32
  }
  func.func @transform_1(%arg0: i32) -> (i32, i32) {
    %c0_i32 = arith.constant 0 : i32
    %c0_i32_0 = arith.constant 0 : i32
    %c0_i32_1 = arith.constant 0 : i32
    return %c0_i32, %c0_i32_0 : i32, i32
  }
  func.func @transform_2(%arg0: i32) -> (i32, i32) {
    %c0_i32 = arith.constant 0 : i32
    %c0_i32_0 = arith.constant 0 : i32
    %c0_i32_1 = arith.constant 0 : i32
    return %c0_i32, %c0_i32_0 : i32, i32
  }
  func.func @transform_3(%arg0: i32) -> (i32, i32) {
    %c0_i32 = arith.constant 0 : i32
    %c0_i32_0 = arith.constant 0 : i32
    %c0_i32_1 = arith.constant 0 : i32
    return %c0_i32, %c0_i32_0 : i32, i32
  }
}

</mosaic_0001>

<llo_original>
// kernel: decoder_layer_forward.1
$region0: #{decoder_layer_forward.1}
  #allocation0 [shape = 'u32[]', space=smem, size = 0x4, offset = 0x4, fixed_abs, tag = 'smem constant byte address 0x4 - core index']
  #allocation1 [shape = 'u32[72,128]{1,0:T(1,128)}', space=vmem, size = 0x9000, scoped, tag = 'internal scratch']
  %s0 = inlined_call_operand.vmem [shape: f32[33,32], index: 0, kind: input, shape index: {}]
  %s1 = inlined_call_operand.vmem [shape: bf16[256,96], index: 1, kind: input, shape index: {}]
  %s2 = inlined_call_operand.vmem [shape: f32[13,96], index: 2, kind: input, shape index: {}]
  %s3 = inlined_call_operand.hbm [shape: f32[16,32], index: 3, kind: output, shape index: {}]
  %s4 = sld [smem:[#allocation0]]
  $region22: #{decoder_layer_forward.1} parent=0
    _
  %s6 = ssub.s32 1, %s4
  %s7 = scalar_select 0, %s6, %s4
  $region1: #{decoder_layer_forward.1} parent=0
    #allocation2 [shape = 'u8[8192]{0}', space=vmem, size = 0x2000, scoped, tag = 'output window, operand 0, single buffered']
    #allocation3 [shape = 's32[1]{0}', space=sflag, size = 0x4, scoped, tag = 'scoped memory for decoder_layer_forward.1']
    %8 = vsyncpa [#allocation3], 0
    // Predicated region
    $region2: #{decoder_layer_forward.1} parent=1 // pred_check
      _
    $region3: #{decoder_layer_forward.1} parent=1 // pred_check_branch
      %10 = sbr.rel (0) target = $region5
    $region4: #{decoder_layer_forward.1} parent=1 // pred_region
      _
    $region5: #{decoder_layer_forward.1} parent=1 // pred_fallthru
      _
    // Predicated region
    $region6: #{decoder_layer_forward.1} parent=1 // pred_check
      _
    $region7: #{decoder_layer_forward.1} parent=1 // pred_check_branch
      %12 = sbr.rel (0) target = $region9
    $region8: #{decoder_layer_forward.1} parent=1 // pred_region
      _
    $region9: #{decoder_layer_forward.1} parent=1 // pred_fallthru
      _
    // Predicated region
    $region10: #{decoder_layer_forward.1} parent=1 // pred_check
      _
    $region11: #{decoder_layer_forward.1} parent=1 // pred_check_branch
      %14 = sbr.rel (0) target = $region13
    $region12: #{decoder_layer_forward.1} parent=1 // pred_region
      _
    $region13: #{decoder_layer_forward.1} parent=1 // pred_fallthru
      _
    %v16 = vld [vmem:[%s0] sm:$0xff]
    %v17 = vld [vmem:[%s0 + $0x8] sm:$0xff]
    %v18 = vld [vmem:[%s0 + $0x10] sm:$0xff]
    %v19 = vld [vmem:[%s0 + $0x18] sm:$0xff]
    %v20 = vld [vmem:[%s0 + $0x20] sm:$0x1]
    %v21 = vpack.c.bf16 %v16, %v16
    %v22 = vld [vmem:[%s1] sm:$0xf]
    %v23 = vld [vmem:[%s1 + $0x4] sm:$0xf]
    %v24 = vld [vmem:[%s1 + $0x8] sm:$0xf]
    %v25 = vld [vmem:[%s1 + $0xc] sm:$0xf]
    %v26 = vld [vmem:[%s2] sm:$0x1]
    %v27 = vperm.slane %v26, 0
    %v32 = vunpack.c.l.b16 %v22
    %v33 = vunpack.c.l.b16 %v23
    %v34 = vunpack.c.l.b16 %v24
    %v35 = vunpack.c.l.b16 %v25
    %v36 = vpack.c.b16 %v33, %v32
    %v37 = vpack.c.b16 %v35, %v34
    %vm40 = vcmask 261120
    %v42 = vsel %vm40, %v21, 0
    %44 = vmatpush.bf16.msra.mxu0 0
    %45 = vmatpush.bf16.msra.mxu0 0
    %46 = vmatpush.bf16.msra.mxu0 0
    %47 = vmatpush.bf16.msra.mxu0 0
    %48 = vmatpush.bf16.msra.mxu0 0
    %49 = vmatpush.bf16.msra.mxu0 0
    %50 = vmatpush.bf16.msra.mxu0 %v37
    %51 = vmatpush.bf16.msra.mxu0 %v36
    %52 = vmatmul.bf16.gmra.mxu0 %v42
    %v53 = vpop.f32.mrf.mxu0
    %v54 = vadd.f32 %v27, %v53
    %v55 = vpop.f32.mrf.mxu0
    %56 = vdwg.mxu0
    %58 = vrot.lane.b32.xlu0 %v54, 120
    %v59 = vpop.permute.xlu0 %58
    %61 = vrot.lane.b32.xlu0 %v54, 112
    %v62 = vpop.permute.xlu0 %61
    %64 = vrot.lane.b32.xlu0 %v54, 104
    %v65 = vpop.permute.xlu0 %64
    %v67 = vrot.slane %v62, 4
    %vm68 = vcmask 1047556
    %v69 = vsel %vm68, %v67, %v54
    %v70 = vrot.slane %v54, 4
    %v71 = vsel %vm68, %v62, %v70
    %v73 = vunpack.c.l.s4 1983009808
    %v74 = vunpack.c.0.s8 %v73
    %v75 = vperm.slane %v69, %v74
    %v77 = vunpack.c.l.s4 1983009808
    %v78 = vunpack.c.0.s8 %v77
    %v79 = vperm.slane %v71, %v78
    %v80 = vrot.slane %v65, 4
    %v81 = vsel %vm68, %v80, %v59
    %v82 = vrot.slane %v59, 4
    %v83 = vsel %vm68, %v65, %v82
    %v85 = vunpack.c.l.s4 1983009808
    %v86 = vunpack.c.0.s8 %v85
    %v87 = vperm.slane %v81, %v86
    %v89 = vunpack.c.l.s4 1983009808
    %v90 = vunpack.c.0.s8 %v89
    %v91 = vperm.slane %v83, %v90
    %v92 = vrot.slane %v87, 4
    %v93 = vsel %vm68, %v92, %v75
    %v94 = vrot.slane %v75, 4
    %v95 = vsel %vm68, %v87, %v94
    %v97 = vunpack.c.l.s4 1934713408
    %v98 = vunpack.c.0.s8 %v97
    %v99 = vperm.slane %v93, %v98
    %v101 = vunpack.c.l.s4 1934713408
    %v102 = vunpack.c.0.s8 %v101
    %v103 = vperm.slane %v95, %v102
    %v104 = vrot.slane %v91, 4
    %v105 = vsel %vm68, %v104, %v79
    %v106 = vrot.slane %v79, 4
    %v107 = vsel %vm68, %v91, %v106
    %v109 = vunpack.c.l.s4 1934713408
    %v110 = vunpack.c.0.s8 %v109
    %v111 = vperm.slane %v105, %v110
    %v113 = vunpack.c.l.s4 1934713408
    %v114 = vunpack.c.0.s8 %v113
    %v115 = vperm.slane %v107, %v114
    %v116 = vrot.slane %v99, 4
    %v117 = vsel %vm68, 0.0, %v116
    %v118 = vrot.slane %v103, 4
    %v119 = vsel %vm68, 0.0, %v118
    %v120 = vrot.slane %v111, 4
    %v121 = vsel %vm68, 0.0, %v120
    %v122 = vrot.slane %v115, 4
    %v123 = vsel %vm68, 0.0, %v122
    %v124 = vsel %vm68, %v118, %v99
    %v126 = vunpack.c.l.s4 1983009808
    %v127 = vunpack.c.0.s8 %v126
    %v128 = vperm.slane %v124, %v127
    %v129 = vrot.slane %v119, 4
    %v130 = vsel %vm68, %v129, %v117
    %v132 = vunpack.c.l.s4 1983009808
    %v133 = vunpack.c.0.s8 %v132
    %v134 = vperm.slane %v130, %v133
    %v135 = vsel %vm68, %v122, %v111
    %v137 = vunpack.c.l.s4 1983009808
    %v138 = vunpack.c.0.s8 %v137
    %v139 = vperm.slane %v135, %v138
    %v140 = vrot.slane %v123, 4
    %v141 = vsel %vm68, %v140, %v121
    %v143 = vunpack.c.l.s4 1983009808
    %v144 = vunpack.c.0.s8 %v143
    %v145 = vperm.slane %v141, %v144
    %v146 = vrot.slane %v134, 4
    %v147 = vsel %vm68, %v146, %v128
    %v148 = vrot.slane %v128, 4
    %v149 = vsel %vm68, %v134, %v148
    %v151 = vunpack.c.l.s4 1934713408
    %v152 = vunpack.c.0.s8 %v151
    %v153 = vperm.slane %v147, %v152
    %v155 = vunpack.c.l.s4 1934713408
    %v156 = vunpack.c.0.s8 %v155
    %v157 = vperm.slane %v149, %v156
    %v158 = vrot.slane %v145, 4
    %v159 = vsel %vm68, %v158, %v139
    %v160 = vrot.slane %v139, 4
    %v161 = vsel %vm68, %v145, %v160
    %v163 = vunpack.c.l.s4 1934713408
    %v164 = vunpack.c.0.s8 %v163
    %v165 = vperm.slane %v159, %v164
    %v167 = vunpack.c.l.s4 1934713408
    %v168 = vunpack.c.0.s8 %v167
    %v169 = vperm.slane %v161, %v168
    %v170 = vrot.slane %v165, 4
    %v171 = vsel %vm68, %v170, %v153
    %v172 = vrot.slane %v153, 4
    %v173 = vsel %vm68, %v165, %v172
    %v174 = vrot.slane %v169, 4
    %v175 = vsel %vm68, %v174, %v157
    %v176 = vrot.slane %v157, 4
    %v177 = vsel %vm68, %v169, %v176
    %178 = vrot.lane.b32.xlu0 %v54, 96
    %v179 = vpop.permute.xlu0 %178
    %180 = vrot.lane.b32.xlu0 %v59, 96
    %v181 = vpop.permute.xlu0 %180
    %182 = vrot.lane.b32.xlu0 %v62, 96
    %v183 = vpop.permute.xlu0 %182
    %184 = vrot.lane.b32.xlu0 %v65, 96
    %v185 = vpop.permute.xlu0 %184
    %v190 = vrot.slane %v183, 4
    %v191 = vsel %vm68, %v190, %v179
    %v192 = vrot.slane %v179, 4
    %v193 = vsel %vm68, %v183, %v192
    %v195 = vunpack.c.l.s4 1983009808
    %v196 = vunpack.c.0.s8 %v195
    %v197 = vperm.slane %v191, %v196
    %v199 = vunpack.c.l.s4 1983009808
    %v200 = vunpack.c.0.s8 %v199
    %v201 = vperm.slane %v193, %v200
    %v202 = vrot.slane %v185, 4
    %v203 = vsel %vm68, %v202, %v181
    %v204 = vrot.slane %v181, 4
    %v205 = vsel %vm68, %v185, %v204
    %v207 = vunpack.c.l.s4 1983009808
    %v208 = vunpack.c.0.s8 %v207
    %v209 = vperm.slane %v203, %v208
    %v211 = vunpack.c.l.s4 1983009808
    %v212 = vunpack.c.0.s8 %v211
    %v213 = vperm.slane %v205, %v212
    %v214 = vrot.slane %v209, 4
    %v215 = vsel %vm68, %v214, %v197
    %v216 = vrot.slane %v197, 4
    %v217 = vsel %vm68, %v209, %v216
    %v219 = vunpack.c.l.s4 1934713408
    %v220 = vunpack.c.0.s8 %v219
    %v221 = vperm.slane %v215, %v220
    %v223 = vunpack.c.l.s4 1934713408
    %v224 = vunpack.c.0.s8 %v223
    %v225 = vperm.slane %v217, %v224
    %v226 = vrot.slane %v213, 4
    %v227 = vsel %vm68, %v226, %v201
    %v228 = vrot.slane %v201, 4
    %v229 = vsel %vm68, %v213, %v228
    %v231 = vunpack.c.l.s4 1934713408
    %v232 = vunpack.c.0.s8 %v231
    %v233 = vperm.slane %v227, %v232
    %v235 = vunpack.c.l.s4 1934713408
    %v236 = vunpack.c.0.s8 %v235
    %v237 = vperm.slane %v229, %v236
    %v238 = vrot.slane %v221, 4
    %v239 = vsel %vm68, 0.0, %v238
    %v240 = vrot.slane %v225, 4
    %v241 = vsel %vm68, 0.0, %v240
    %v242 = vrot.slane %v233, 4
    %v243 = vsel %vm68, 0.0, %v242
    %v244 = vrot.slane %v237, 4
    %v245 = vsel %vm68, 0.0, %v244
    %v246 = vsel %vm68, %v240, %v221
    %v248 = vunpack.c.l.s4 1983009808
    %v249 = vunpack.c.0.s8 %v248
    %v250 = vperm.slane %v246, %v249
    %v251 = vrot.slane %v241, 4
    %v252 = vsel %vm68, %v251, %v239
    %v254 = vunpack.c.l.s4 1983009808
    %v255 = vunpack.c.0.s8 %v254
    %v256 = vperm.slane %v252, %v255
    %v257 = vsel %vm68, %v244, %v233
    %v259 = vunpack.c.l.s4 1983009808
    %v260 = vunpack.c.0.s8 %v259
    %v261 = vperm.slane %v257, %v260
    %v262 = vrot.slane %v245, 4
    %v263 = vsel %vm68, %v262, %v243
    %v265 = vunpack.c.l.s4 1983009808
    %v266 = vunpack.c.0.s8 %v265
    %v267 = vperm.slane %v263, %v266
    %v268 = vrot.slane %v256, 4
    %v269 = vsel %vm68, %v268, %v250
    %v270 = vrot.slane %v250, 4
    %v271 = vsel %vm68, %v256, %v270
    %v273 = vunpack.c.l.s4 1934713408
    %v274 = vunpack.c.0.s8 %v273
    %v275 = vperm.slane %v269, %v274
    %v277 = vunpack.c.l.s4 1934713408
    %v278 = vunpack.c.0.s8 %v277
    %v279 = vperm.slane %v271, %v278
    %v280 = vrot.slane %v267, 4
    %v281 = vsel %vm68, %v280, %v261
    %v282 = vrot.slane %v261, 4
    %v283 = vsel %vm68, %v267, %v282
    %v285 = vunpack.c.l.s4 1934713408
    %v286 = vunpack.c.0.s8 %v285
    %v287 = vperm.slane %v281, %v286
    %v289 = vunpack.c.l.s4 1934713408
    %v290 = vunpack.c.0.s8 %v289
    %v291 = vperm.slane %v283, %v290
    %v292 = vrot.slane %v287, 4
    %v293 = vsel %vm68, %v292, %v275
    %v294 = vrot.slane %v275, 4
    %v295 = vsel %vm68, %v287, %v294
    %v296 = vrot.slane %v291, 4
    %v297 = vsel %vm68, %v296, %v279
    %v298 = vrot.slane %v279, 4
    %v299 = vsel %vm68, %v291, %v298
    %300 = vrot.lane.b32.xlu0 %v54, 64
    %v301 = vpop.permute.xlu0 %300
    %302 = vrot.lane.b32.xlu0 %v59, 64
    %v303 = vpop.permute.xlu0 %302
    %304 = vrot.lane.b32.xlu0 %v62, 64
    %v305 = vpop.permute.xlu0 %304
    %306 = vrot.lane.b32.xlu0 %v65, 64
    %v307 = vpop.permute.xlu0 %306
    %v312 = vrot.slane %v305, 4
    %v313 = vsel %vm68, %v312, %v301
    %v314 = vrot.slane %v301, 4
    %v315 = vsel %vm68, %v305, %v314
    %v317 = vunpack.c.l.s4 1983009808
    %v318 = vunpack.c.0.s8 %v317
    %v319 = vperm.slane %v313, %v318
    %v321 = vunpack.c.l.s4 1983009808
    %v322 = vunpack.c.0.s8 %v321
    %v323 = vperm.slane %v315, %v322
    %v324 = vrot.slane %v307, 4
    %v325 = vsel %vm68, %v324, %v303
    %v326 = vrot.slane %v303, 4
    %v327 = vsel %vm68, %v307, %v326
    %v329 = vunpack.c.l.s4 1983009808
    %v330 = vunpack.c.0.s8 %v329
    %v331 = vperm.slane %v325, %v330
    %v333 = vunpack.c.l.s4 1983009808
    %v334 = vunpack.c.0.s8 %v333
    %v335 = vperm.slane %v327, %v334
    %v336 = vrot.slane %v331, 4
    %v337 = vsel %vm68, %v336, %v319
    %v338 = vrot.slane %v319, 4
    %v339 = vsel %vm68, %v331, %v338
    %v341 = vunpack.c.l.s4 1934713408
    %v342 = vunpack.c.0.s8 %v341
    %v343 = vperm.slane %v337, %v342
    %v345 = vunpack.c.l.s4 1934713408
    %v346 = vunpack.c.0.s8 %v345
    %v347 = vperm.slane %v339, %v346
    %v348 = vrot.slane %v335, 4
    %v349 = vsel %vm68, %v348, %v323
    %v350 = vrot.slane %v323, 4
    %v351 = vsel %vm68, %v335, %v350
    %v353 = vunpack.c.l.s4 1934713408
    %v354 = vunpack.c.0.s8 %v353
    %v355 = vperm.slane %v349, %v354
    %v357 = vunpack.c.l.s4 1934713408
    %v358 = vunpack.c.0.s8 %v357
    %v359 = vperm.slane %v351, %v358
    %v360 = vrot.slane %v343, 4
    %v361 = vsel %vm68, 0.0, %v360
    %v362 = vrot.slane %v347, 4
    %v363 = vsel %vm68, 0.0, %v362
    %v364 = vrot.slane %v355, 4
    %v365 = vsel %vm68, 0.0, %v364
    %v366 = vrot.slane %v359, 4
    %v367 = vsel %vm68, 0.0, %v366
    %v368 = vsel %vm68, %v362, %v343
    %v370 = vunpack.c.l.s4 1983009808
    %v371 = vunpack.c.0.s8 %v370
    %v372 = vperm.slane %v368, %v371
    %v373 = vrot.slane %v363, 4
    %v374 = vsel %vm68, %v373, %v361
    %v376 = vunpack.c.l.s4 1983009808
    %v377 = vunpack.c.0.s8 %v376
    %v378 = vperm.slane %v374, %v377
    %v379 = vsel %vm68, %v366, %v355
    %v381 = vunpack.c.l.s4 1983009808
    %v382 = vunpack.c.0.s8 %v381
    %v383 = vperm.slane %v379, %v382
    %v384 = vrot.slane %v367, 4
    %v385 = vsel %vm68, %v384, %v365
    %v387 = vunpack.c.l.s4 1983009808
    %v388 = vunpack.c.0.s8 %v387
    %v389 = vperm.slane %v385, %v388
    %v390 = vrot.slane %v378, 4
    %v391 = vsel %vm68, %v390, %v372
    %v392 = vrot.slane %v372, 4
    %v393 = vsel %vm68, %v378, %v392
    %v395 = vunpack.c.l.s4 1934713408
    %v396 = vunpack.c.0.s8 %v395
    %v397 = vperm.slane %v391, %v396
    %v399 = vunpack.c.l.s4 1934713408
    %v400 = vunpack.c.0.s8 %v399
    %v401 = vperm.slane %v393, %v400
    %v402 = vrot.slane %v389, 4
    %v403 = vsel %vm68, %v402, %v383
    %v404 = vrot.slane %v383, 4
    %v405 = vsel %vm68, %v389, %v404
    %v407 = vunpack.c.l.s4 1934713408
    %v408 = vunpack.c.0.s8 %v407
    %v409 = vperm.slane %v403, %v408
    %v411 = vunpack.c.l.s4 1934713408
    %v412 = vunpack.c.0.s8 %v411
    %v413 = vperm.slane %v405, %v412
    %v414 = vrot.slane %v409, 4
    %v415 = vsel %vm68, %v414, %v397
    %v416 = vrot.slane %v397, 4
    %v417 = vsel %vm68, %v409, %v416
    %v418 = vrot.slane %v413, 4
    %v419 = vsel %vm68, %v418, %v401
    %v420 = vrot.slane %v401, 4
    %v421 = vsel %vm68, %v413, %v420
    %v422 = vpack.c.bf16 %v171, %v171
    %v423 = vpack.c.bf16 %v173, %v173
    %v424 = vpack.c.bf16 %v175, %v175
    %v425 = vpack.c.bf16 %v177, %v177
    %v426 = vpack.c.bf16 %v293, %v293
    %v427 = vpack.c.bf16 %v295, %v295
    %v428 = vpack.c.bf16 %v297, %v297
    %v429 = vpack.c.bf16 %v299, %v299
    %vm430 = vcmask 64512
    %v432 = vsel %vm430, %v422, 0
    %v435 = vsel %vm430, %v426, 0
    %437 = vmatpush.bf16.xpose.msra.mxu0 0
    %438 = vmatpush.bf16.xpose.msra.mxu0 0
    %439 = vmatpush.bf16.xpose.msra.mxu0 0
    %440 = vmatpush.bf16.xpose.msra.mxu0 0
    %441 = vmatpush.bf16.xpose.msra.mxu0 0
    %442 = vmatpush.bf16.xpose.msra.mxu0 0
    %443 = vmatpush.bf16.xpose.msra.mxu0 0
    %444 = vmatpush.bf16.xpose.msra.mxu0 %v435
    %445 = vmatmul.bf16.gmra.mxu0 %v432
    %v446 = vpop.f32.mrf.mxu0
    %v447 = vadd.f32 %v19, %v446
    %v448 = vpop.f32.mrf.mxu0
    %449 = vdwg.mxu0
    %v451 = vsel %vm430, %v423, 0
    %v454 = vsel %vm430, %v427, 0
    %456 = vmatpush.bf16.xpose.msra.mxu0 0
    %457 = vmatpush.bf16.xpose.msra.mxu0 0
    %458 = vmatpush.bf16.xpose.msra.mxu0 0
    %459 = vmatpush.bf16.xpose.msra.mxu0 0
    %460 = vmatpush.bf16.xpose.msra.mxu0 0
    %461 = vmatpush.bf16.xpose.msra.mxu0 0
    %462 = vmatpush.bf16.xpose.msra.mxu0 0
    %463 = vmatpush.bf16.xpose.msra.mxu0 %v454
    %464 = vmatmul.bf16.gmra.mxu0 %v451
    %v465 = vpop.f32.mrf.mxu0
    %v466 = vadd.f32 %v19, %v465
    %v467 = vpop.f32.mrf.mxu0
    %468 = vdwg.mxu0
    %v470 = vsel %vm430, %v424, 0
    %v473 = vsel %vm430, %v428, 0
    %475 = vmatpush.bf16.xpose.msra.mxu0 0
    %476 = vmatpush.bf16.xpose.msra.mxu0 0
    %477 = vmatpush.bf16.xpose.msra.mxu0 0
    %478 = vmatpush.bf16.xpose.msra.mxu0 0
    %479 = vmatpush.bf16.xpose.msra.mxu0 0
    %480 = vmatpush.bf16.xpose.msra.mxu0 0
    %481 = vmatpush.bf16.xpose.msra.mxu0 0
    %482 = vmatpush.bf16.xpose.msra.mxu0 %v473
    %483 = vmatmul.bf16.gmra.mxu0 %v470
    %v484 = vpop.f32.mrf.mxu0
    %v485 = vadd.f32 %v19, %v484
    %v486 = vpop.f32.mrf.mxu0
    %487 = vdwg.mxu0
    %v489 = vsel %vm430, %v425, 0
    %v492 = vsel %vm430, %v429, 0
    %494 = vmatpush.bf16.xpose.msra.mxu0 0
    %495 = vmatpush.bf16.xpose.msra.mxu0 0
    %496 = vmatpush.bf16.xpose.msra.mxu0 0
    %497 = vmatpush.bf16.xpose.msra.mxu0 0
    %498 = vmatpush.bf16.xpose.msra.mxu0 0
    %499 = vmatpush.bf16.xpose.msra.mxu0 0
    %500 = vmatpush.bf16.xpose.msra.mxu0 0
    %501 = vmatpush.bf16.xpose.msra.mxu0 %v492
    %502 = vmatmul.bf16.gmra.mxu0 %v489
    %v503 = vpop.f32.mrf.mxu0
    %v504 = vadd.f32 %v19, %v503
    %v505 = vpop.f32.mrf.mxu0
    %506 = vdwg.mxu0
    %v507 = vsel %vm430, %v447, -inf
    %508 = vmax.xlane.f32.xlu0 %v507
    %v509 = vpop.xlane.xlu0 %508
    %v510 = vsel %vm430, %v466, -inf
    %511 = vmax.xlane.f32.xlu0 %v510
    %v512 = vpop.xlane.xlu0 %511
    %v513 = vsel %vm430, %v485, -inf
    %514 = vmax.xlane.f32.xlu0 %v513
    %v515 = vpop.xlane.xlu0 %514
    %v516 = vsel %vm430, %v504, -inf
    %517 = vmax.xlane.f32.xlu0 %v516
    %v518 = vpop.xlane.xlu0 %517
    %v519 = vsub.f32 %v447, %v509
    %v520 = vsub.f32 %v466, %v512
    %v521 = vsub.f32 %v485, %v515
    %v522 = vsub.f32 %v504, %v518
    %v523 = vmul.f32 %v519, 1.442695
    %v524 = vpow.pop %v523
    %v525 = vmul.f32 %v520, 1.442695
    %v526 = vpow.pop %v525
    %v527 = vmul.f32 %v521, 1.442695
    %v528 = vpow.pop %v527
    %v529 = vmul.f32 %v522, 1.442695
    %v530 = vpow.pop %v529
    %v531 = vsel %vm430, %v524, 0.0
    %532 = vadd.xlane.f32.xlu0 %v531
    %v533 = vpop.xlane.xlu0 %532
    %v534 = vsel %vm430, %v526, 0.0
    %535 = vadd.xlane.f32.xlu0 %v534
    %v536 = vpop.xlane.xlu0 %535
    %v537 = vsel %vm430, %v528, 0.0
    %538 = vadd.xlane.f32.xlu0 %v537
    %v539 = vpop.xlane.xlu0 %538
    %v540 = vsel %vm430, %v530, 0.0
    %541 = vadd.xlane.f32.xlu0 %v540
    %v542 = vpop.xlane.xlu0 %541
    %v543 = vrcp.pop %v533
    %v544 = vmul.f32 %v533, %v543
    %v545 = vsub.f32 1.0, %v544
    %v546 = vmul.f32 %v543, %v545
    %v547 = vadd.f32 %v543, %v546
    %vm548 = vweird.f32 %v533
    %vm549 = vweird.f32 %v543
    %vm550 = vmor %vm548, %vm549
    %v551 = vsel %vm550, %v543, %v547
    %v552 = vand.u32 2147483647, %v533
    %vm553 = vcmp.eq.f32.partialorder %v552, 8.507059e+37
    %v554 = vand.u32 %v533, 2147483648
    %v555 = vor.u32 1.1754944e-38, %v554
    %v556 = vsel %vm553, %v555, %v551
    %v557 = vrcp.pop %v536
    %v558 = vmul.f32 %v536, %v557
    %v559 = vsub.f32 1.0, %v558
    %v560 = vmul.f32 %v557, %v559
    %v561 = vadd.f32 %v557, %v560
    %vm562 = vweird.f32 %v536
    %vm563 = vweird.f32 %v557
    %vm564 = vmor %vm562, %vm563
    %v565 = vsel %vm564, %v557, %v561
    %v566 = vand.u32 2147483647, %v536
    %vm567 = vcmp.eq.f32.partialorder %v566, 8.507059e+37
    %v568 = vand.u32 %v536, 2147483648
    %v569 = vor.u32 1.1754944e-38, %v568
    %v570 = vsel %vm567, %v569, %v565
    %v571 = vrcp.pop %v539
    %v572 = vmul.f32 %v539, %v571
    %v573 = vsub.f32 1.0, %v572
    %v574 = vmul.f32 %v571, %v573
    %v575 = vadd.f32 %v571, %v574
    %vm576 = vweird.f32 %v539
    %vm577 = vweird.f32 %v571
    %vm578 = vmor %vm576, %vm577
    %v579 = vsel %vm578, %v571, %v575
    %v580 = vand.u32 2147483647, %v539
    %vm581 = vcmp.eq.f32.partialorder %v580, 8.507059e+37
    %v582 = vand.u32 %v539, 2147483648
    %v583 = vor.u32 1.1754944e-38, %v582
    %v584 = vsel %vm581, %v583, %v579
    %v585 = vrcp.pop %v542
    %v586 = vmul.f32 %v542, %v585
    %v587 = vsub.f32 1.0, %v586
    %v588 = vmul.f32 %v585, %v587
    %v589 = vadd.f32 %v585, %v588
    %vm590 = vweird.f32 %v542
    %vm591 = vweird.f32 %v585
    %vm592 = vmor %vm590, %vm591
    %v593 = vsel %vm592, %v585, %v589
    %v594 = vand.u32 2147483647, %v542
    %vm595 = vcmp.eq.f32.partialorder %v594, 8.507059e+37
    %v596 = vand.u32 %v542, 2147483648
    %v597 = vor.u32 1.1754944e-38, %v596
    %v598 = vsel %vm595, %v597, %v593
    %v599 = vmul.f32 %v524, %v556
    %v600 = vmul.f32 %v526, %v570
    %v601 = vmul.f32 %v528, %v584
    %v602 = vmul.f32 %v530, %v598
    %v603 = vpack.c.bf16 %v599, %v599
    %v604 = vpack.c.bf16 %v600, %v600
    %v605 = vpack.c.bf16 %v601, %v601
    %v606 = vpack.c.bf16 %v602, %v602
    %v607 = vpack.c.bf16 %v415, %v415
    %v608 = vpack.c.bf16 %v417, %v417
    %v609 = vpack.c.bf16 %v419, %v419
    %v610 = vpack.c.bf16 %v421, %v421
    %v612 = vsel %vm430, %v603, 0
    %vm614 = vcmask 1043456
    %v616 = vsel %vm614, %v607, 0
    %618 = vmatpush.bf16.msra.mxu0 0
    %619 = vmatpush.bf16.msra.mxu0 0
    %620 = vmatpush.bf16.msra.mxu0 0
    %621 = vmatpush.bf16.msra.mxu0 0
    %622 = vmatpush.bf16.msra.mxu0 0
    %623 = vmatpush.bf16.msra.mxu0 0
    %624 = vmatpush.bf16.msra.mxu0 0
    %625 = vmatpush.bf16.msra.mxu0 %v616
    %626 = vmatmul.bf16.gmra.mxu0 %v612
    %v627 = vpop.f32.mrf.mxu0
    %v628 = vadd.f32 0.0, %v627
    %v629 = vpop.f32.mrf.mxu0
    %630 = vdwg.mxu0
    %v632 = vsel %vm430, %v604, 0
    %v635 = vsel %vm614, %v608, 0
    %637 = vmatpush.bf16.msra.mxu0 0
    %638 = vmatpush.bf16.msra.mxu0 0
    %639 = vmatpush.bf16.msra.mxu0 0
    %640 = vmatpush.bf16.msra.mxu0 0
    %641 = vmatpush.bf16.msra.mxu0 0
    %642 = vmatpush.bf16.msra.mxu0 0
    %643 = vmatpush.bf16.msra.mxu0 0
    %644 = vmatpush.bf16.msra.mxu0 %v635
    %645 = vmatmul.bf16.gmra.mxu0 %v632
    %v646 = vpop.f32.mrf.mxu0
    %v647 = vadd.f32 0.0, %v646
    %v648 = vpop.f32.mrf.mxu0
    %649 = vdwg.mxu0
    %v651 = vsel %vm430, %v605, 0
    %v654 = vsel %vm614, %v609, 0
    %656 = vmatpush.bf16.msra.mxu0 0
    %657 = vmatpush.bf16.msra.mxu0 0
    %658 = vmatpush.bf16.msra.mxu0 0
    %659 = vmatpush.bf16.msra.mxu0 0
    %660 = vmatpush.bf16.msra.mxu0 0
    %661 = vmatpush.bf16.msra.mxu0 0
    %662 = vmatpush.bf16.msra.mxu0 0
    %663 = vmatpush.bf16.msra.mxu0 %v654
    %664 = vmatmul.bf16.gmra.mxu0 %v651
    %v665 = vpop.f32.mrf.mxu0
    %v666 = vadd.f32 0.0, %v665
    %v667 = vpop.f32.mrf.mxu0
    %668 = vdwg.mxu0
    %v670 = vsel %vm430, %v606, 0
    %v673 = vsel %vm614, %v610, 0
    %675 = vmatpush.bf16.msra.mxu0 0
    %676 = vmatpush.bf16.msra.mxu0 0
    %677 = vmatpush.bf16.msra.mxu0 0
    %678 = vmatpush.bf16.msra.mxu0 0
    %679 = vmatpush.bf16.msra.mxu0 0
    %680 = vmatpush.bf16.msra.mxu0 0
    %681 = vmatpush.bf16.msra.mxu0 0
    %682 = vmatpush.bf16.msra.mxu0 %v673
    %683 = vmatmul.bf16.gmra.mxu0 %v670
    %v684 = vpop.f32.mrf.mxu0
    %v685 = vadd.f32 0.0, %v684
    %v686 = vpop.f32.mrf.mxu0
    %687 = vdwg.mxu0
    %v688 = vrot.slane %v666, 4
    %v689 = vsel %vm68, %v688, %v628
    %v690 = vrot.slane %v628, 4
    %v691 = vsel %vm68, %v666, %v690
    %v693 = vunpack.c.l.s4 1983009808
    %v694 = vunpack.c.0.s8 %v693
    %v695 = vperm.slane %v689, %v694
    %v697 = vunpack.c.l.s4 1983009808
    %v698 = vunpack.c.0.s8 %v697
    %v699 = vperm.slane %v691, %v698
    %v700 = vrot.slane %v685, 4
    %v701 = vsel %vm68, %v700, %v647
    %v702 = vrot.slane %v647, 4
    %v703 = vsel %vm68, %v685, %v702
    %v705 = vunpack.c.l.s4 1983009808
    %v706 = vunpack.c.0.s8 %v705
    %v707 = vperm.slane %v701, %v706
    %v709 = vunpack.c.l.s4 1983009808
    %v710 = vunpack.c.0.s8 %v709
    %v711 = vperm.slane %v703, %v710
    %v712 = vrot.slane %v707, 4
    %v713 = vsel %vm68, %v712, %v695
    %v714 = vrot.slane %v695, 4
    %v715 = vsel %vm68, %v707, %v714
    %v717 = vunpack.c.l.s4 1934713408
    %v718 = vunpack.c.0.s8 %v717
    %v719 = vperm.slane %v713, %v718
    %v721 = vunpack.c.l.s4 1934713408
    %v722 = vunpack.c.0.s8 %v721
    %v723 = vperm.slane %v715, %v722
    %v724 = vrot.slane %v711, 4
    %v725 = vsel %vm68, %v724, %v699
    %v726 = vrot.slane %v699, 4
    %v727 = vsel %vm68, %v711, %v726
    %v729 = vunpack.c.l.s4 1934713408
    %v730 = vunpack.c.0.s8 %v729
    %v731 = vperm.slane %v725, %v730
    %v733 = vunpack.c.l.s4 1934713408
    %v734 = vunpack.c.0.s8 %v733
    %v735 = vperm.slane %v727, %v734
    %v736 = vrot.slane %v719, 4
    %v737 = vsel %vm68, 0.0, %v736
    %v738 = vrot.slane %v723, 4
    %v739 = vsel %vm68, 0.0, %v738
    %v740 = vrot.slane %v731, 4
    %v741 = vsel %vm68, 0.0, %v740
    %v742 = vrot.slane %v735, 4
    %v743 = vsel %vm68, 0.0, %v742
    %v744 = vsel %vm68, %v738, %v719
    %v746 = vunpack.c.l.s4 1983009808
    %v747 = vunpack.c.0.s8 %v746
    %v748 = vperm.slane %v744, %v747
    %v749 = vrot.slane %v739, 4
    %v750 = vsel %vm68, %v749, %v737
    %v752 = vunpack.c.l.s4 1983009808
    %v753 = vunpack.c.0.s8 %v752
    %v754 = vperm.slane %v750, %v753
    %v755 = vsel %vm68, %v742, %v731
    %v757 = vunpack.c.l.s4 1983009808
    %v758 = vunpack.c.0.s8 %v757
    %v759 = vperm.slane %v755, %v758
    %v760 = vrot.slane %v743, 4
    %v761 = vsel %vm68, %v760, %v741
    %v763 = vunpack.c.l.s4 1983009808
    %v764 = vunpack.c.0.s8 %v763
    %v765 = vperm.slane %v761, %v764
    %v766 = vrot.slane %v754, 4
    %v767 = vsel %vm68, %v766, %v748
    %v768 = vrot.slane %v748, 4
    %v769 = vsel %vm68, %v754, %v768
    %v771 = vunpack.c.l.s4 1934713408
    %v772 = vunpack.c.0.s8 %v771
    %v773 = vperm.slane %v767, %v772
    %v775 = vunpack.c.l.s4 1934713408
    %v776 = vunpack.c.0.s8 %v775
    %v777 = vperm.slane %v769, %v776
    %v778 = vrot.slane %v765, 4
    %v779 = vsel %vm68, %v778, %v759
    %v780 = vrot.slane %v759, 4
    %v781 = vsel %vm68, %v765, %v780
    %v783 = vunpack.c.l.s4 1934713408
    %v784 = vunpack.c.0.s8 %v783
    %v785 = vperm.slane %v779, %v784
    %v787 = vunpack.c.l.s4 1934713408
    %v788 = vunpack.c.0.s8 %v787
    %v789 = vperm.slane %v781, %v788
    %v790 = vrot.slane %v785, 4
    %v791 = vsel %vm68, %v790, %v773
    %v792 = vrot.slane %v773, 4
    %v793 = vsel %vm68, %v785, %v792
    %v794 = vrot.slane %v789, 4
    %v795 = vsel %vm68, %v794, %v777
    %v796 = vrot.slane %v777, 4
    %v797 = vsel %vm68, %v789, %v796
    %799 = vrot.lane.b32.xlu0 %v793, 8
    %v800 = vpop.permute.xlu0 %799
    %803 = vrot.lane.b32.xlu0 %v795, 16
    %v804 = vpop.permute.xlu0 %803
    %807 = vrot.lane.b32.xlu0 %v797, 24
    %v808 = vpop.permute.xlu0 %807
    %v810 = vsel %vm430, %v791, %v800
    %vm811 = vcmask 130048
    %v812 = vsel %vm811, %v810, %v804
    %vm813 = vcmask 195584
    %v814 = vsel %vm813, %v812, %v808
    %v815 = vpack.c.bf16 %v814, %v814
    %v816 = vld [vmem:[%s1 + $0x10] sm:$0xf]
    %v817 = vld [vmem:[%s1 + $0x14] sm:$0xf]
    %v818 = vld [vmem:[%s1 + $0x18] sm:$0xf]
    %v819 = vld [vmem:[%s1 + $0x1c] sm:$0xf]
    %v820 = vld [vmem:[%s2 + $0x1] sm:$0x1]
    %v821 = vperm.slane %v820, 0
    %v826 = vunpack.c.l.b16 %v816
    %v827 = vunpack.c.l.b16 %v817
    %v828 = vunpack.c.l.b16 %v818
    %v829 = vunpack.c.l.b16 %v819
    %v830 = vpack.c.b16 %v827, %v826
    %v831 = vpack.c.b16 %v829, %v828
    %v835 = vsel %vm40, %v815, 0
    %837 = vmatpush.bf16.msra.mxu0 0
    %838 = vmatpush.bf16.msra.mxu0 0
    %839 = vmatpush.bf16.msra.mxu0 0
    %840 = vmatpush.bf16.msra.mxu0 0
    %841 = vmatpush.bf16.msra.mxu0 0
    %842 = vmatpush.bf16.msra.mxu0 0
    %843 = vmatpush.bf16.msra.mxu0 %v831
    %844 = vmatpush.bf16.msra.mxu0 %v830
    %845 = vmatmul.bf16.gmra.mxu0 %v835
    %v846 = vpop.f32.mrf.mxu0
    %v847 = vadd.f32 %v821, %v846
    %v848 = vpop.f32.mrf.mxu0
    %849 = vdwg.mxu0
    %v850 = vadd.f32 %v16, %v847
    %v851 = vadd.f32 %v17, %v847
    %v852 = vsel %vm40, %v850, 0.0
    %853 = vadd.xlane.f32.xlu0 %v852
    %v854 = vpop.xlane.xlu0 %853
    %v855 = vsel %vm40, %v851, 0.0
    %856 = vadd.xlane.f32.xlu0 %v855
    %v857 = vpop.xlane.xlu0 %856
    %v858 = vrcp.pop 32.0
    %v859 = vmul.f32 32.0, %v858
    %v860 = vsub.f32 1.0, %v859
    %v861 = vmul.f32 %v858, %v860
    %v862 = vadd.f32 %v858, %v861
    %vm863 = vweird.f32 %v858
    %v864 = vsel %vm863, %v858, %v862
    %v865 = vmul.f32 %v854, %v864
    %v866 = vmul.f32 %v857, %v864
    %v867 = vsub.f32 %v850, %v865
    %v868 = vsub.f32 %v851, %v866
    %v869 = vmul.f32 %v867, %v867
    %v870 = vmul.f32 %v868, %v868
    %v871 = vsel %vm40, %v869, 0.0
    %872 = vadd.xlane.f32.xlu0 %v871
    %v873 = vpop.xlane.xlu0 %872
    %v874 = vsel %vm40, %v870, 0.0
    %875 = vadd.xlane.f32.xlu0 %v874
    %v876 = vpop.xlane.xlu0 %875
    %v877 = vmul.f32 %v873, %v864
    %v878 = vmul.f32 %v876, %v864
    %v879 = vadd.f32 %v877, 1e-06
    %v880 = vadd.f32 %v878, 1e-06
    %v881 = vrsqrt.pop %v879
    %v882 = vmul.f32 %v881, %v879
    %v883 = vmul.f32 %v882, %v881
    %v884 = vmul.f32 0.5, %v883
    %v885 = vsub.f32 1.5, %v884
    %v886 = vmul.f32 %v881, %v885
    %vm887 = vweird.f32 %v879
    %vm888 = vweird.f32 %v881
    %vm889 = vmor %vm887, %vm888
    %v890 = vsel %vm889, %v881, %v886
    %v891 = vrsqrt.pop %v880
    %v892 = vmul.f32 %v891, %v880
    %v893 = vmul.f32 %v892, %v891
    %v894 = vmul.f32 0.5, %v893
    %v895 = vsub.f32 1.5, %v894
    %v896 = vmul.f32 %v891, %v895
    %vm897 = vweird.f32 %v880
    %vm898 = vweird.f32 %v891
    %vm899 = vmor %vm897, %vm898
    %v900 = vsel %vm899, %v891, %v896
    %v901 = vmul.f32 %v867, %v890
    %v902 = vmul.f32 %v868, %v900
    %v903 = vld [vmem:[%s2 + $0x7] sm:$0x1]
    %v904 = vperm.slane %v903, 0
    %v905 = vmul.f32 %v901, %v904
    %v906 = vmul.f32 %v902, %v904
    %v907 = vld [vmem:[%s2 + $0x8] sm:$0x1]
    %v908 = vperm.slane %v907, 0
    %v909 = vadd.f32 %v905, %v908
    %v910 = vadd.f32 %v906, %v908
    %v911 = vpack.c.bf16 %v18, %v18
    %v912 = vld [vmem:[%s1 + $0x20] sm:$0xf]
    %v913 = vld [vmem:[%s1 + $0x24] sm:$0xf]
    %v914 = vld [vmem:[%s1 + $0x28] sm:$0xf]
    %v915 = vld [vmem:[%s1 + $0x2c] sm:$0xf]
    %v916 = vld [vmem:[%s2 + $0x2] sm:$0x1]
    %v917 = vperm.slane %v916, 0
    %v922 = vunpack.c.l.b16 %v912
    %v923 = vunpack.c.l.b16 %v913
    %v924 = vunpack.c.l.b16 %v914
    %v925 = vunpack.c.l.b16 %v915
    %v926 = vpack.c.b16 %v923, %v922
    %v927 = vpack.c.b16 %v925, %v924
    %v931 = vsel %vm40, %v911, 0
    %933 = vmatpush.bf16.msra.mxu0 0
    %934 = vmatpush.bf16.msra.mxu0 0
    %935 = vmatpush.bf16.msra.mxu0 0
    %936 = vmatpush.bf16.msra.mxu0 0
    %937 = vmatpush.bf16.msra.mxu0 0
    %938 = vmatpush.bf16.msra.mxu0 0
    %939 = vmatpush.bf16.msra.mxu0 %v927
    %940 = vmatpush.bf16.msra.mxu0 %v926
    %941 = vmatmul.bf16.gmra.mxu0 %v931
    %v942 = vpop.f32.mrf.mxu0
    %v943 = vadd.f32 %v917, %v942
    %v944 = vpop.f32.mrf.mxu0
    %945 = vdwg.mxu0
    %v946 = vpack.c.bf16 %v909, %v909
    %v947 = vld [vmem:[%s1 + $0x30] sm:$0xf]
    %v948 = vld [vmem:[%s1 + $0x34] sm:$0xf]
    %v949 = vld [vmem:[%s1 + $0x38] sm:$0xf]
    %v950 = vld [vmem:[%s1 + $0x3c] sm:$0xf]
    %v951 = vld [vmem:[%s2 + $0x3] sm:$0x1]
    %v952 = vperm.slane %v951, 0
    %v957 = vunpack.c.l.b16 %v947
    %v958 = vunpack.c.l.b16 %v948
    %v959 = vunpack.c.l.b16 %v949
    %v960 = vunpack.c.l.b16 %v950
    %v961 = vpack.c.b16 %v958, %v957
    %v962 = vpack.c.b16 %v960, %v959
    %v966 = vsel %vm40, %v946, 0
    %968 = vmatpush.bf16.msra.mxu0 0
    %969 = vmatpush.bf16.msra.mxu0 0
    %970 = vmatpush.bf16.msra.mxu0 0
    %971 = vmatpush.bf16.msra.mxu0 0
    %972 = vmatpush.bf16.msra.mxu0 0
    %973 = vmatpush.bf16.msra.mxu0 0
    %974 = vmatpush.bf16.msra.mxu0 %v962
    %975 = vmatpush.bf16.msra.mxu0 %v961
    %976 = vmatmul.bf16.gmra.mxu0 %v966
    %v977 = vpop.f32.mrf.mxu0
    %v978 = vadd.f32 %v952, %v977
    %v979 = vpop.f32.mrf.mxu0
    %980 = vdwg.mxu0
    %982 = vrot.lane.b32.xlu0 %v943, 120
    %v983 = vpop.permute.xlu0 %982
    %985 = vrot.lane.b32.xlu0 %v943, 112
    %v986 = vpop.permute.xlu0 %985
    %988 = vrot.lane.b32.xlu0 %v943, 104
    %v989 = vpop.permute.xlu0 %988
    %v991 = vrot.slane %v986, 4
    %v992 = vsel %vm68, %v991, %v943
    %v993 = vrot.slane %v943, 4
    %v994 = vsel %vm68, %v986, %v993
    %v996 = vunpack.c.l.s4 1983009808
    %v997 = vunpack.c.0.s8 %v996
    %v998 = vperm.slane %v992, %v997
    %v1000 = vunpack.c.l.s4 1983009808
    %v1001 = vunpack.c.0.s8 %v1000
    %v1002 = vperm.slane %v994, %v1001
    %v1003 = vrot.slane %v989, 4
    %v1004 = vsel %vm68, %v1003, %v983
    %v1005 = vrot.slane %v983, 4
    %v1006 = vsel %vm68, %v989, %v1005
    %v1008 = vunpack.c.l.s4 1983009808
    %v1009 = vunpack.c.0.s8 %v1008
    %v1010 = vperm.slane %v1004, %v1009
    %v1012 = vunpack.c.l.s4 1983009808
    %v1013 = vunpack.c.0.s8 %v1012
    %v1014 = vperm.slane %v1006, %v1013
    %v1015 = vrot.slane %v1010, 4
    %v1016 = vsel %vm68, %v1015, %v998
    %v1017 = vrot.slane %v998, 4
    %v1018 = vsel %vm68, %v1010, %v1017
    %v1020 = vunpack.c.l.s4 1934713408
    %v1021 = vunpack.c.0.s8 %v1020
    %v1022 = vperm.slane %v1016, %v1021
    %v1024 = vunpack.c.l.s4 1934713408
    %v1025 = vunpack.c.0.s8 %v1024
    %v1026 = vperm.slane %v1018, %v1025
    %v1027 = vrot.slane %v1014, 4
    %v1028 = vsel %vm68, %v1027, %v1002
    %v1029 = vrot.slane %v1002, 4
    %v1030 = vsel %vm68, %v1014, %v1029
    %v1032 = vunpack.c.l.s4 1934713408
    %v1033 = vunpack.c.0.s8 %v1032
    %v1034 = vperm.slane %v1028, %v1033
    %v1036 = vunpack.c.l.s4 1934713408
    %v1037 = vunpack.c.0.s8 %v1036
    %v1038 = vperm.slane %v1030, %v1037
    %v1039 = vrot.slane %v1022, 4
    %v1040 = vsel %vm68, 0.0, %v1039
    %v1041 = vrot.slane %v1026, 4
    %v1042 = vsel %vm68, 0.0, %v1041
    %v1043 = vrot.slane %v1034, 4
    %v1044 = vsel %vm68, 0.0, %v1043
    %v1045 = vrot.slane %v1038, 4
    %v1046 = vsel %vm68, 0.0, %v1045
    %v1047 = vsel %vm68, %v1041, %v1022
    %v1049 = vunpack.c.l.s4 1983009808
    %v1050 = vunpack.c.0.s8 %v1049
    %v1051 = vperm.slane %v1047, %v1050
    %v1052 = vrot.slane %v1042, 4
    %v1053 = vsel %vm68, %v1052, %v1040
    %v1055 = vunpack.c.l.s4 1983009808
    %v1056 = vunpack.c.0.s8 %v1055
    %v1057 = vperm.slane %v1053, %v1056
    %v1058 = vsel %vm68, %v1045, %v1034
    %v1060 = vunpack.c.l.s4 1983009808
    %v1061 = vunpack.c.0.s8 %v1060
    %v1062 = vperm.slane %v1058, %v1061
    %v1063 = vrot.slane %v1046, 4
    %v1064 = vsel %vm68, %v1063, %v1044
    %v1066 = vunpack.c.l.s4 1983009808
    %v1067 = vunpack.c.0.s8 %v1066
    %v1068 = vperm.slane %v1064, %v1067
    %v1069 = vrot.slane %v1057, 4
    %v1070 = vsel %vm68, %v1069, %v1051
    %v1071 = vrot.slane %v1051, 4
    %v1072 = vsel %vm68, %v1057, %v1071
    %v1074 = vunpack.c.l.s4 1934713408
    %v1075 = vunpack.c.0.s8 %v1074
    %v1076 = vperm.slane %v1070, %v1075
    %v1078 = vunpack.c.l.s4 1934713408
    %v1079 = vunpack.c.0.s8 %v1078
    %v1080 = vperm.slane %v1072, %v1079
    %v1081 = vrot.slane %v1068, 4
    %v1082 = vsel %vm68, %v1081, %v1062
    %v1083 = vrot.slane %v1062, 4
    %v1084 = vsel %vm68, %v1068, %v1083
    %v1086 = vunpack.c.l.s4 1934713408
    %v1087 = vunpack.c.0.s8 %v1086
    %v1088 = vperm.slane %v1082, %v1087
    %v1090 = vunpack.c.l.s4 1934713408
    %v1091 = vunpack.c.0.s8 %v1090
    %v1092 = vperm.slane %v1084, %v1091
    %v1093 = vrot.slane %v1088, 4
    %v1094 = vsel %vm68, %v1093, %v1076
    %v1095 = vrot.slane %v1076, 4
    %v1096 = vsel %vm68, %v1088, %v1095
    %v1097 = vrot.slane %v1092, 4
    %v1098 = vsel %vm68, %v1097, %v1080
    %v1099 = vrot.slane %v1080, 4
    %v1100 = vsel %vm68, %v1092, %v1099
    %1101 = vrot.lane.b32.xlu0 %v943, 96
    %v1102 = vpop.permute.xlu0 %1101
    %1103 = vrot.lane.b32.xlu0 %v983, 96
    %v1104 = vpop.permute.xlu0 %1103
    %1105 = vrot.lane.b32.xlu0 %v986, 96
    %v1106 = vpop.permute.xlu0 %1105
    %1107 = vrot.lane.b32.xlu0 %v989, 96
    %v1108 = vpop.permute.xlu0 %1107
    %v1113 = vrot.slane %v1106, 4
    %v1114 = vsel %vm68, %v1113, %v1102
    %v1115 = vrot.slane %v1102, 4
    %v1116 = vsel %vm68, %v1106, %v1115
    %v1118 = vunpack.c.l.s4 1983009808
    %v1119 = vunpack.c.0.s8 %v1118
    %v1120 = vperm.slane %v1114, %v1119
    %v1122 = vunpack.c.l.s4 1983009808
    %v1123 = vunpack.c.0.s8 %v1122
    %v1124 = vperm.slane %v1116, %v1123
    %v1125 = vrot.slane %v1108, 4
    %v1126 = vsel %vm68, %v1125, %v1104
    %v1127 = vrot.slane %v1104, 4
    %v1128 = vsel %vm68, %v1108, %v1127
    %v1130 = vunpack.c.l.s4 1983009808
    %v1131 = vunpack.c.0.s8 %v1130
    %v1132 = vperm.slane %v1126, %v1131
    %v1134 = vunpack.c.l.s4 1983009808
    %v1135 = vunpack.c.0.s8 %v1134
    %v1136 = vperm.slane %v1128, %v1135
    %v1137 = vrot.slane %v1132, 4
    %v1138 = vsel %vm68, %v1137, %v1120
    %v1139 = vrot.slane %v1120, 4
    %v1140 = vsel %vm68, %v1132, %v1139
    %v1142 = vunpack.c.l.s4 1934713408
    %v1143 = vunpack.c.0.s8 %v1142
    %v1144 = vperm.slane %v1138, %v1143
    %v1146 = vunpack.c.l.s4 1934713408
    %v1147 = vunpack.c.0.s8 %v1146
    %v1148 = vperm.slane %v1140, %v1147
    %v1149 = vrot.slane %v1136, 4
    %v1150 = vsel %vm68, %v1149, %v1124
    %v1151 = vrot.slane %v1124, 4
    %v1152 = vsel %vm68, %v1136, %v1151
    %v1154 = vunpack.c.l.s4 1934713408
    %v1155 = vunpack.c.0.s8 %v1154
    %v1156 = vperm.slane %v1150, %v1155
    %v1158 = vunpack.c.l.s4 1934713408
    %v1159 = vunpack.c.0.s8 %v1158
    %v1160 = vperm.slane %v1152, %v1159
    %v1161 = vrot.slane %v1144, 4
    %v1162 = vsel %vm68, 0.0, %v1161
    %v1163 = vrot.slane %v1148, 4
    %v1164 = vsel %vm68, 0.0, %v1163
    %v1165 = vrot.slane %v1156, 4
    %v1166 = vsel %vm68, 0.0, %v1165
    %v1167 = vrot.slane %v1160, 4
    %v1168 = vsel %vm68, 0.0, %v1167
    %v1169 = vsel %vm68, %v1163, %v1144
    %v1171 = vunpack.c.l.s4 1983009808
    %v1172 = vunpack.c.0.s8 %v1171
    %v1173 = vperm.slane %v1169, %v1172
    %v1174 = vrot.slane %v1164, 4
    %v1175 = vsel %vm68, %v1174, %v1162
    %v1177 = vunpack.c.l.s4 1983009808
    %v1178 = vunpack.c.0.s8 %v1177
    %v1179 = vperm.slane %v1175, %v1178
    %v1180 = vsel %vm68, %v1167, %v1156
    %v1182 = vunpack.c.l.s4 1983009808
    %v1183 = vunpack.c.0.s8 %v1182
    %v1184 = vperm.slane %v1180, %v1183
    %v1185 = vrot.slane %v1168, 4
    %v1186 = vsel %vm68, %v1185, %v1166
    %v1188 = vunpack.c.l.s4 1983009808
    %v1189 = vunpack.c.0.s8 %v1188
    %v1190 = vperm.slane %v1186, %v1189
    %v1191 = vrot.slane %v1179, 4
    %v1192 = vsel %vm68, %v1191, %v1173
    %v1193 = vrot.slane %v1173, 4
    %v1194 = vsel %vm68, %v1179, %v1193
    %v1196 = vunpack.c.l.s4 1934713408
    %v1197 = vunpack.c.0.s8 %v1196
    %v1198 = vperm.slane %v1192, %v1197
    %v1200 = vunpack.c.l.s4 1934713408
    %v1201 = vunpack.c.0.s8 %v1200
    %v1202 = vperm.slane %v1194, %v1201
    %v1203 = vrot.slane %v1190, 4
    %v1204 = vsel %vm68, %v1203, %v1184
    %v1205 = vrot.slane %v1184, 4
    %v1206 = vsel %vm68, %v1190, %v1205
    %v1208 = vunpack.c.l.s4 1934713408
    %v1209 = vunpack.c.0.s8 %v1208
    %v1210 = vperm.slane %v1204, %v1209
    %v1212 = vunpack.c.l.s4 1934713408
    %v1213 = vunpack.c.0.s8 %v1212
    %v1214 = vperm.slane %v1206, %v1213
    %v1215 = vrot.slane %v1210, 4
    %v1216 = vsel %vm68, %v1215, %v1198
    %v1217 = vrot.slane %v1198, 4
    %v1218 = vsel %vm68, %v1210, %v1217
    %v1219 = vrot.slane %v1214, 4
    %v1220 = vsel %vm68, %v1219, %v1202
    %v1221 = vrot.slane %v1202, 4
    %v1222 = vsel %vm68, %v1214, %v1221
    %1224 = vrot.lane.b32.xlu0 %v978, 120
    %v1225 = vpop.permute.xlu0 %1224
    %1227 = vrot.lane.b32.xlu0 %v978, 112
    %v1228 = vpop.permute.xlu0 %1227
    %1230 = vrot.lane.b32.xlu0 %v978, 104
    %v1231 = vpop.permute.xlu0 %1230
    %v1233 = vrot.slane %v1228, 4
    %v1234 = vsel %vm68, %v1233, %v978
    %v1235 = vrot.slane %v978, 4
    %v1236 = vsel %vm68, %v1228, %v1235
    %v1238 = vunpack.c.l.s4 1983009808
    %v1239 = vunpack.c.0.s8 %v1238
    %v1240 = vperm.slane %v1234, %v1239
    %v1242 = vunpack.c.l.s4 1983009808
    %v1243 = vunpack.c.0.s8 %v1242
    %v1244 = vperm.slane %v1236, %v1243
    %v1245 = vrot.slane %v1231, 4
    %v1246 = vsel %vm68, %v1245, %v1225
    %v1247 = vrot.slane %v1225, 4
    %v1248 = vsel %vm68, %v1231, %v1247
    %v1250 = vunpack.c.l.s4 1983009808
    %v1251 = vunpack.c.0.s8 %v1250
    %v1252 = vperm.slane %v1246, %v1251
    %v1254 = vunpack.c.l.s4 1983009808
    %v1255 = vunpack.c.0.s8 %v1254
    %v1256 = vperm.slane %v1248, %v1255
    %v1257 = vrot.slane %v1252, 4
    %v1258 = vsel %vm68, %v1257, %v1240
    %v1259 = vrot.slane %v1240, 4
    %v1260 = vsel %vm68, %v1252, %v1259
    %v1262 = vunpack.c.l.s4 1934713408
    %v1263 = vunpack.c.0.s8 %v1262
    %v1264 = vperm.slane %v1258, %v1263
    %v1266 = vunpack.c.l.s4 1934713408
    %v1267 = vunpack.c.0.s8 %v1266
    %v1268 = vperm.slane %v1260, %v1267
    %v1269 = vrot.slane %v1256, 4
    %v1270 = vsel %vm68, %v1269, %v1244
    %v1271 = vrot.slane %v1244, 4
    %v1272 = vsel %vm68, %v1256, %v1271
    %v1274 = vunpack.c.l.s4 1934713408
    %v1275 = vunpack.c.0.s8 %v1274
    %v1276 = vperm.slane %v1270, %v1275
    %v1278 = vunpack.c.l.s4 1934713408
    %v1279 = vunpack.c.0.s8 %v1278
    %v1280 = vperm.slane %v1272, %v1279
    %v1281 = vrot.slane %v1264, 4
    %v1282 = vsel %vm68, 0.0, %v1281
    %v1283 = vrot.slane %v1268, 4
    %v1284 = vsel %vm68, 0.0, %v1283
    %v1285 = vrot.slane %v1276, 4
    %v1286 = vsel %vm68, 0.0, %v1285
    %v1287 = vrot.slane %v1280, 4
    %v1288 = vsel %vm68, 0.0, %v1287
    %v1289 = vsel %vm68, %v1283, %v1264
    %v1291 = vunpack.c.l.s4 1983009808
    %v1292 = vunpack.c.0.s8 %v1291
    %v1293 = vperm.slane %v1289, %v1292
    %v1294 = vrot.slane %v1284, 4
    %v1295 = vsel %vm68, %v1294, %v1282
    %v1297 = vunpack.c.l.s4 1983009808
    %v1298 = vunpack.c.0.s8 %v1297
    %v1299 = vperm.slane %v1295, %v1298
    %v1300 = vsel %vm68, %v1287, %v1276
    %v1302 = vunpack.c.l.s4 1983009808
    %v1303 = vunpack.c.0.s8 %v1302
    %v1304 = vperm.slane %v1300, %v1303
    %v1305 = vrot.slane %v1288, 4
    %v1306 = vsel %vm68, %v1305, %v1286
    %v1308 = vunpack.c.l.s4 1983009808
    %v1309 = vunpack.c.0.s8 %v1308
    %v1310 = vperm.slane %v1306, %v1309
    %v1311 = vrot.slane %v1299, 4
    %v1312 = vsel %vm68, %v1311, %v1293
    %v1313 = vrot.slane %v1293, 4
    %v1314 = vsel %vm68, %v1299, %v1313
    %v1316 = vunpack.c.l.s4 1934713408
    %v1317 = vunpack.c.0.s8 %v1316
    %v1318 = vperm.slane %v1312, %v1317
    %v1320 = vunpack.c.l.s4 1934713408
    %v1321 = vunpack.c.0.s8 %v1320
    %v1322 = vperm.slane %v1314, %v1321
    %v1323 = vrot.slane %v1310, 4
    %v1324 = vsel %vm68, %v1323, %v1304
    %v1325 = vrot.slane %v1304, 4
    %v1326 = vsel %vm68, %v1310, %v1325
    %v1328 = vunpack.c.l.s4 1934713408
    %v1329 = vunpack.c.0.s8 %v1328
    %v1330 = vperm.slane %v1324, %v1329
    %v1332 = vunpack.c.l.s4 1934713408
    %v1333 = vunpack.c.0.s8 %v1332
    %v1334 = vperm.slane %v1326, %v1333
    %v1335 = vrot.slane %v1330, 4
    %v1336 = vsel %vm68, %v1335, %v1318
    %v1337 = vrot.slane %v1318, 4
    %v1338 = vsel %vm68, %v1330, %v1337
    %v1339 = vrot.slane %v1334, 4
    %v1340 = vsel %vm68, %v1339, %v1322
    %v1341 = vrot.slane %v1322, 4
    %v1342 = vsel %vm68, %v1334, %v1341
    %v1343 = vpack.c.bf16 %v1094, %v1094
    %v1344 = vpack.c.bf16 %v1096, %v1096
    %v1345 = vpack.c.bf16 %v1098, %v1098
    %v1346 = vpack.c.bf16 %v1100, %v1100
    %v1347 = vpack.c.bf16 %v1216, %v1216
    %v1348 = vpack.c.bf16 %v1218, %v1218
    %v1349 = vpack.c.bf16 %v1220, %v1220
    %v1350 = vpack.c.bf16 %v1222, %v1222
    %v1351 = vperm.slane %v20, 0
    %v1353 = vsel %vm430, %v1343, 0
    %v1356 = vsel %vm430, %v1347, 0
    %1358 = vmatpush.bf16.xpose.msra.mxu0 0
    %1359 = vmatpush.bf16.xpose.msra.mxu0 0
    %1360 = vmatpush.bf16.xpose.msra.mxu0 0
    %1361 = vmatpush.bf16.xpose.msra.mxu0 0
    %1362 = vmatpush.bf16.xpose.msra.mxu0 0
    %1363 = vmatpush.bf16.xpose.msra.mxu0 0
    %1364 = vmatpush.bf16.xpose.msra.mxu0 0
    %1365 = vmatpush.bf16.xpose.msra.mxu0 %v1356
    %1366 = vmatmul.bf16.gmra.mxu0 %v1353
    %v1367 = vpop.f32.mrf.mxu0
    %v1368 = vadd.f32 %v1351, %v1367
    %v1369 = vpop.f32.mrf.mxu0
    %1370 = vdwg.mxu0
    %v1372 = vsel %vm430, %v1344, 0
    %v1375 = vsel %vm430, %v1348, 0
    %1377 = vmatpush.bf16.xpose.msra.mxu0 0
    %1378 = vmatpush.bf16.xpose.msra.mxu0 0
    %1379 = vmatpush.bf16.xpose.msra.mxu0 0
    %1380 = vmatpush.bf16.xpose.msra.mxu0 0
    %1381 = vmatpush.bf16.xpose.msra.mxu0 0
    %1382 = vmatpush.bf16.xpose.msra.mxu0 0
    %1383 = vmatpush.bf16.xpose.msra.mxu0 0
    %1384 = vmatpush.bf16.xpose.msra.mxu0 %v1375
    %1385 = vmatmul.bf16.gmra.mxu0 %v1372
    %v1386 = vpop.f32.mrf.mxu0
    %v1387 = vadd.f32 %v1351, %v1386
    %v1388 = vpop.f32.mrf.mxu0
    %1389 = vdwg.mxu0
    %v1391 = vsel %vm430, %v1345, 0
    %v1394 = vsel %vm430, %v1349, 0
    %1396 = vmatpush.bf16.xpose.msra.mxu0 0
    %1397 = vmatpush.bf16.xpose.msra.mxu0 0
    %1398 = vmatpush.bf16.xpose.msra.mxu0 0
    %1399 = vmatpush.bf16.xpose.msra.mxu0 0
    %1400 = vmatpush.bf16.xpose.msra.mxu0 0
    %1401 = vmatpush.bf16.xpose.msra.mxu0 0
    %1402 = vmatpush.bf16.xpose.msra.mxu0 0
    %1403 = vmatpush.bf16.xpose.msra.mxu0 %v1394
    %1404 = vmatmul.bf16.gmra.mxu0 %v1391
    %v1405 = vpop.f32.mrf.mxu0
    %v1406 = vadd.f32 %v1351, %v1405
    %v1407 = vpop.f32.mrf.mxu0
    %1408 = vdwg.mxu0
    %v1410 = vsel %vm430, %v1346, 0
    %v1413 = vsel %vm430, %v1350, 0
    %1415 = vmatpush.bf16.xpose.msra.mxu0 0
    %1416 = vmatpush.bf16.xpose.msra.mxu0 0
    %1417 = vmatpush.bf16.xpose.msra.mxu0 0
    %1418 = vmatpush.bf16.xpose.msra.mxu0 0
    %1419 = vmatpush.bf16.xpose.msra.mxu0 0
    %1420 = vmatpush.bf16.xpose.msra.mxu0 0
    %1421 = vmatpush.bf16.xpose.msra.mxu0 0
    %1422 = vmatpush.bf16.xpose.msra.mxu0 %v1413
    %1423 = vmatmul.bf16.gmra.mxu0 %v1410
    %v1424 = vpop.f32.mrf.mxu0
    %v1425 = vadd.f32 %v1351, %v1424
    %v1426 = vpop.f32.mrf.mxu0
    %1427 = vdwg.mxu0
    %v1428 = vsel %vm430, %v1368, -inf
    %1429 = vmax.xlane.f32.xlu0 %v1428
    %v1430 = vpop.xlane.xlu0 %1429
    %v1431 = vsel %vm430, %v1387, -inf
    %1432 = vmax.xlane.f32.xlu0 %v1431
    %v1433 = vpop.xlane.xlu0 %1432
    %v1434 = vsel %vm430, %v1406, -inf
    %1435 = vmax.xlane.f32.xlu0 %v1434
    %v1436 = vpop.xlane.xlu0 %1435
    %v1437 = vsel %vm430, %v1425, -inf
    %1438 = vmax.xlane.f32.xlu0 %v1437
    %v1439 = vpop.xlane.xlu0 %1438
    %v1440 = vsub.f32 %v1368, %v1430
    %v1441 = vsub.f32 %v1387, %v1433
    %v1442 = vsub.f32 %v1406, %v1436
    %v1443 = vsub.f32 %v1425, %v1439
    %v1444 = vmul.f32 %v1440, 1.442695
    %v1445 = vpow.pop %v1444
    %v1446 = vmul.f32 %v1441, 1.442695
    %v1447 = vpow.pop %v1446
    %v1448 = vmul.f32 %v1442, 1.442695
    %v1449 = vpow.pop %v1448
    %v1450 = vmul.f32 %v1443, 1.442695
    %v1451 = vpow.pop %v1450
    %v1452 = vsel %vm430, %v1445, 0.0
    %1453 = vadd.xlane.f32.xlu0 %v1452
    %v1454 = vpop.xlane.xlu0 %1453
    %v1455 = vsel %vm430, %v1447, 0.0
    %1456 = vadd.xlane.f32.xlu0 %v1455
    %v1457 = vpop.xlane.xlu0 %1456
    %v1458 = vsel %vm430, %v1449, 0.0
    %1459 = vadd.xlane.f32.xlu0 %v1458
    %v1460 = vpop.xlane.xlu0 %1459
    %v1461 = vsel %vm430, %v1451, 0.0
    %1462 = vadd.xlane.f32.xlu0 %v1461
    %v1463 = vpop.xlane.xlu0 %1462
    %v1464 = vrcp.pop %v1454
    %v1465 = vmul.f32 %v1454, %v1464
    %v1466 = vsub.f32 1.0, %v1465
    %v1467 = vmul.f32 %v1464, %v1466
    %v1468 = vadd.f32 %v1464, %v1467
    %vm1469 = vweird.f32 %v1454
    %vm1470 = vweird.f32 %v1464
    %vm1471 = vmor %vm1469, %vm1470
    %v1472 = vsel %vm1471, %v1464, %v1468
    %v1473 = vand.u32 2147483647, %v1454
    %vm1474 = vcmp.eq.f32.partialorder %v1473, 8.507059e+37
    %v1475 = vand.u32 %v1454, 2147483648
    %v1476 = vor.u32 1.1754944e-38, %v1475
    %v1477 = vsel %vm1474, %v1476, %v1472
    %v1478 = vrcp.pop %v1457
    %v1479 = vmul.f32 %v1457, %v1478
    %v1480 = vsub.f32 1.0, %v1479
    %v1481 = vmul.f32 %v1478, %v1480
    %v1482 = vadd.f32 %v1478, %v1481
    %vm1483 = vweird.f32 %v1457
    %vm1484 = vweird.f32 %v1478
    %vm1485 = vmor %vm1483, %vm1484
    %v1486 = vsel %vm1485, %v1478, %v1482
    %v1487 = vand.u32 2147483647, %v1457
    %vm1488 = vcmp.eq.f32.partialorder %v1487, 8.507059e+37
    %v1489 = vand.u32 %v1457, 2147483648
    %v1490 = vor.u32 1.1754944e-38, %v1489
    %v1491 = vsel %vm1488, %v1490, %v1486
    %v1492 = vrcp.pop %v1460
    %v1493 = vmul.f32 %v1460, %v1492
    %v1494 = vsub.f32 1.0, %v1493
    %v1495 = vmul.f32 %v1492, %v1494
    %v1496 = vadd.f32 %v1492, %v1495
    %vm1497 = vweird.f32 %v1460
    %vm1498 = vweird.f32 %v1492
    %vm1499 = vmor %vm1497, %vm1498
    %v1500 = vsel %vm1499, %v1492, %v1496
    %v1501 = vand.u32 2147483647, %v1460
    %vm1502 = vcmp.eq.f32.partialorder %v1501, 8.507059e+37
    %v1503 = vand.u32 %v1460, 2147483648
    %v1504 = vor.u32 1.1754944e-38, %v1503
    %v1505 = vsel %vm1502, %v1504, %v1500
    %v1506 = vrcp.pop %v1463
    %v1507 = vmul.f32 %v1463, %v1506
    %v1508 = vsub.f32 1.0, %v1507
    %v1509 = vmul.f32 %v1506, %v1508
    %v1510 = vadd.f32 %v1506, %v1509
    %vm1511 = vweird.f32 %v1463
    %vm1512 = vweird.f32 %v1506
    %vm1513 = vmor %vm1511, %vm1512
    %v1514 = vsel %vm1513, %v1506, %v1510
    %v1515 = vand.u32 2147483647, %v1463
    %vm1516 = vcmp.eq.f32.partialorder %v1515, 8.507059e+37
    %v1517 = vand.u32 %v1463, 2147483648
    %v1518 = vor.u32 1.1754944e-38, %v1517
    %v1519 = vsel %vm1516, %v1518, %v1514
    %v1520 = vmul.f32 %v1445, %v1477
    %v1521 = vmul.f32 %v1447, %v1491
    %v1522 = vmul.f32 %v1449, %v1505
    %v1523 = vmul.f32 %v1451, %v1519
    %v1524 = vpack.c.bf16 %v1520, %v1520
    %v1525 = vpack.c.bf16 %v1521, %v1521
    %v1526 = vpack.c.bf16 %v1522, %v1522
    %v1527 = vpack.c.bf16 %v1523, %v1523
    %v1528 = vpack.c.bf16 %v1336, %v1336
    %v1529 = vpack.c.bf16 %v1338, %v1338
    %v1530 = vpack.c.bf16 %v1340, %v1340
    %v1531 = vpack.c.bf16 %v1342, %v1342
    %v1533 = vsel %vm430, %v1524, 0
    %v1536 = vsel %vm614, %v1528, 0
    %1538 = vmatpush.bf16.msra.mxu0 0
    %1539 = vmatpush.bf16.msra.mxu0 0
    %1540 = vmatpush.bf16.msra.mxu0 0
    %1541 = vmatpush.bf16.msra.mxu0 0
    %1542 = vmatpush.bf16.msra.mxu0 0
    %1543 = vmatpush.bf16.msra.mxu0 0
    %1544 = vmatpush.bf16.msra.mxu0 0
    %1545 = vmatpush.bf16.msra.mxu0 %v1536
    %1546 = vmatmul.bf16.gmra.mxu0 %v1533
    %v1547 = vpop.f32.mrf.mxu0
    %v1548 = vadd.f32 0.0, %v1547
    %v1549 = vpop.f32.mrf.mxu0
    %1550 = vdwg.mxu0
    %v1552 = vsel %vm430, %v1525, 0
    %v1555 = vsel %vm614, %v1529, 0
    %1557 = vmatpush.bf16.msra.mxu0 0
    %1558 = vmatpush.bf16.msra.mxu0 0
    %1559 = vmatpush.bf16.msra.mxu0 0
    %1560 = vmatpush.bf16.msra.mxu0 0
    %1561 = vmatpush.bf16.msra.mxu0 0
    %1562 = vmatpush.bf16.msra.mxu0 0
    %1563 = vmatpush.bf16.msra.mxu0 0
    %1564 = vmatpush.bf16.msra.mxu0 %v1555
    %1565 = vmatmul.bf16.gmra.mxu0 %v1552
    %v1566 = vpop.f32.mrf.mxu0
    %v1567 = vadd.f32 0.0, %v1566
    %v1568 = vpop.f32.mrf.mxu0
    %1569 = vdwg.mxu0
    %v1571 = vsel %vm430, %v1526, 0
    %v1574 = vsel %vm614, %v1530, 0
    %1576 = vmatpush.bf16.msra.mxu0 0
    %1577 = vmatpush.bf16.msra.mxu0 0
    %1578 = vmatpush.bf16.msra.mxu0 0
    %1579 = vmatpush.bf16.msra.mxu0 0
    %1580 = vmatpush.bf16.msra.mxu0 0
    %1581 = vmatpush.bf16.msra.mxu0 0
    %1582 = vmatpush.bf16.msra.mxu0 0
    %1583 = vmatpush.bf16.msra.mxu0 %v1574
    %1584 = vmatmul.bf16.gmra.mxu0 %v1571
    %v1585 = vpop.f32.mrf.mxu0
    %v1586 = vadd.f32 0.0, %v1585
    %v1587 = vpop.f32.mrf.mxu0
    %1588 = vdwg.mxu0
    %v1590 = vsel %vm430, %v1527, 0
    %v1593 = vsel %vm614, %v1531, 0
    %1595 = vmatpush.bf16.msra.mxu0 0
    %1596 = vmatpush.bf16.msra.mxu0 0
    %1597 = vmatpush.bf16.msra.mxu0 0
    %1598 = vmatpush.bf16.msra.mxu0 0
    %1599 = vmatpush.bf16.msra.mxu0 0
    %1600 = vmatpush.bf16.msra.mxu0 0
    %1601 = vmatpush.bf16.msra.mxu0 0
    %1602 = vmatpush.bf16.msra.mxu0 %v1593
    %1603 = vmatmul.bf16.gmra.mxu0 %v1590
    %v1604 = vpop.f32.mrf.mxu0
    %v1605 = vadd.f32 0.0, %v1604
    %v1606 = vpop.f32.mrf.mxu0
    %1607 = vdwg.mxu0
    %v1608 = vrot.slane %v1586, 4
    %v1609 = vsel %vm68, %v1608, %v1548
    %v1610 = vrot.slane %v1548, 4
    %v1611 = vsel %vm68, %v1586, %v1610
    %v1613 = vunpack.c.l.s4 1983009808
    %v1614 = vunpack.c.0.s8 %v1613
    %v1615 = vperm.slane %v1609, %v1614
    %v1617 = vunpack.c.l.s4 1983009808
    %v1618 = vunpack.c.0.s8 %v1617
    %v1619 = vperm.slane %v1611, %v1618
    %v1620 = vrot.slane %v1605, 4
    %v1621 = vsel %vm68, %v1620, %v1567
    %v1622 = vrot.slane %v1567, 4
    %v1623 = vsel %vm68, %v1605, %v1622
    %v1625 = vunpack.c.l.s4 1983009808
    %v1626 = vunpack.c.0.s8 %v1625
    %v1627 = vperm.slane %v1621, %v1626
    %v1629 = vunpack.c.l.s4 1983009808
    %v1630 = vunpack.c.0.s8 %v1629
    %v1631 = vperm.slane %v1623, %v1630
    %v1632 = vrot.slane %v1627, 4
    %v1633 = vsel %vm68, %v1632, %v1615
    %v1634 = vrot.slane %v1615, 4
    %v1635 = vsel %vm68, %v1627, %v1634
    %v1637 = vunpack.c.l.s4 1934713408
    %v1638 = vunpack.c.0.s8 %v1637
    %v1639 = vperm.slane %v1633, %v1638
    %v1641 = vunpack.c.l.s4 1934713408
    %v1642 = vunpack.c.0.s8 %v1641
    %v1643 = vperm.slane %v1635, %v1642
    %v1644 = vrot.slane %v1631, 4
    %v1645 = vsel %vm68, %v1644, %v1619
    %v1646 = vrot.slane %v1619, 4
    %v1647 = vsel %vm68, %v1631, %v1646
    %v1649 = vunpack.c.l.s4 1934713408
    %v1650 = vunpack.c.0.s8 %v1649
    %v1651 = vperm.slane %v1645, %v1650
    %v1653 = vunpack.c.l.s4 1934713408
    %v1654 = vunpack.c.0.s8 %v1653
    %v1655 = vperm.slane %v1647, %v1654
    %v1656 = vrot.slane %v1639, 4
    %v1657 = vsel %vm68, 0.0, %v1656
    %v1658 = vrot.slane %v1643, 4
    %v1659 = vsel %vm68, 0.0, %v1658
    %v1660 = vrot.slane %v1651, 4
    %v1661 = vsel %vm68, 0.0, %v1660
    %v1662 = vrot.slane %v1655, 4
    %v1663 = vsel %vm68, 0.0, %v1662
    %v1664 = vsel %vm68, %v1658, %v1639
    %v1666 = vunpack.c.l.s4 1983009808
    %v1667 = vunpack.c.0.s8 %v1666
    %v1668 = vperm.slane %v1664, %v1667
    %v1669 = vrot.slane %v1659, 4
    %v1670 = vsel %vm68, %v1669, %v1657
    %v1672 = vunpack.c.l.s4 1983009808
    %v1673 = vunpack.c.0.s8 %v1672
    %v1674 = vperm.slane %v1670, %v1673
    %v1675 = vsel %vm68, %v1662, %v1651
    %v1677 = vunpack.c.l.s4 1983009808
    %v1678 = vunpack.c.0.s8 %v1677
    %v1679 = vperm.slane %v1675, %v1678
    %v1680 = vrot.slane %v1663, 4
    %v1681 = vsel %vm68, %v1680, %v1661
    %v1683 = vunpack.c.l.s4 1983009808
    %v1684 = vunpack.c.0.s8 %v1683
    %v1685 = vperm.slane %v1681, %v1684
    %v1686 = vrot.slane %v1674, 4
    %v1687 = vsel %vm68, %v1686, %v1668
    %v1688 = vrot.slane %v1668, 4
    %v1689 = vsel %vm68, %v1674, %v1688
    %v1691 = vunpack.c.l.s4 1934713408
    %v1692 = vunpack.c.0.s8 %v1691
    %v1693 = vperm.slane %v1687, %v1692
    %v1695 = vunpack.c.l.s4 1934713408
    %v1696 = vunpack.c.0.s8 %v1695
    %v1697 = vperm.slane %v1689, %v1696
    %v1698 = vrot.slane %v1685, 4
    %v1699 = vsel %vm68, %v1698, %v1679
    %v1700 = vrot.slane %v1679, 4
    %v1701 = vsel %vm68, %v1685, %v1700
    %v1703 = vunpack.c.l.s4 1934713408
    %v1704 = vunpack.c.0.s8 %v1703
    %v1705 = vperm.slane %v1699, %v1704
    %v1707 = vunpack.c.l.s4 1934713408
    %v1708 = vunpack.c.0.s8 %v1707
    %v1709 = vperm.slane %v1701, %v1708
    %v1710 = vrot.slane %v1705, 4
    %v1711 = vsel %vm68, %v1710, %v1693
    %v1712 = vrot.slane %v1693, 4
    %v1713 = vsel %vm68, %v1705, %v1712
    %v1714 = vrot.slane %v1709, 4
    %v1715 = vsel %vm68, %v1714, %v1697
    %v1716 = vrot.slane %v1697, 4
    %v1717 = vsel %vm68, %v1709, %v1716
    %1719 = vrot.lane.b32.xlu0 %v1713, 8
    %v1720 = vpop.permute.xlu0 %1719
    %1723 = vrot.lane.b32.xlu0 %v1715, 16
    %v1724 = vpop.permute.xlu0 %1723
    %1727 = vrot.lane.b32.xlu0 %v1717, 24
    %v1728 = vpop.permute.xlu0 %1727
    %v1730 = vsel %vm430, %v1711, %v1720
    %v1731 = vsel %vm811, %v1730, %v1724
    %v1732 = vsel %vm813, %v1731, %v1728
    %v1733 = vpack.c.bf16 %v1732, %v1732
    %v1734 = vld [vmem:[%s1 + $0x40] sm:$0xf]
    %v1735 = vld [vmem:[%s1 + $0x44] sm:$0xf]
    %v1736 = vld [vmem:[%s1 + $0x48] sm:$0xf]
    %v1737 = vld [vmem:[%s1 + $0x4c] sm:$0xf]
    %v1738 = vld [vmem:[%s2 + $0x4] sm:$0x1]
    %v1739 = vperm.slane %v1738, 0
    %v1744 = vunpack.c.l.b16 %v1734
    %v1745 = vunpack.c.l.b16 %v1735
    %v1746 = vunpack.c.l.b16 %v1736
    %v1747 = vunpack.c.l.b16 %v1737
    %v1748 = vpack.c.b16 %v1745, %v1744
    %v1749 = vpack.c.b16 %v1747, %v1746
    %v1753 = vsel %vm40, %v1733, 0
    %1755 = vmatpush.bf16.msra.mxu0 0
    %1756 = vmatpush.bf16.msra.mxu0 0
    %1757 = vmatpush.bf16.msra.mxu0 0
    %1758 = vmatpush.bf16.msra.mxu0 0
    %1759 = vmatpush.bf16.msra.mxu0 0
    %1760 = vmatpush.bf16.msra.mxu0 0
    %1761 = vmatpush.bf16.msra.mxu0 %v1749
    %1762 = vmatpush.bf16.msra.mxu0 %v1748
    %1763 = vmatmul.bf16.gmra.mxu0 %v1753
    %v1764 = vpop.f32.mrf.mxu0
    %v1765 = vadd.f32 %v1739, %v1764
    %v1766 = vpop.f32.mrf.mxu0
    %1767 = vdwg.mxu0
    %v1768 = vadd.f32 %v909, %v1765
    %v1769 = vadd.f32 %v910, %v1765
    %v1770 = vsel %vm40, %v1768, 0.0
    %1771 = vadd.xlane.f32.xlu0 %v1770
    %v1772 = vpop.xlane.xlu0 %1771
    %v1773 = vsel %vm40, %v1769, 0.0
    %1774 = vadd.xlane.f32.xlu0 %v1773
    %v1775 = vpop.xlane.xlu0 %1774
    %v1776 = vmul.f32 %v1772, %v864
    %v1777 = vmul.f32 %v1775, %v864
    %v1778 = vsub.f32 %v1768, %v1776
    %v1779 = vsub.f32 %v1769, %v1777
    %v1780 = vmul.f32 %v1778, %v1778
    %v1781 = vmul.f32 %v1779, %v1779
    %v1782 = vsel %vm40, %v1780, 0.0
    %1783 = vadd.xlane.f32.xlu0 %v1782
    %v1784 = vpop.xlane.xlu0 %1783
    %v1785 = vsel %vm40, %v1781, 0.0
    %1786 = vadd.xlane.f32.xlu0 %v1785
    %v1787 = vpop.xlane.xlu0 %1786
    %v1788 = vmul.f32 %v1784, %v864
    %v1789 = vmul.f32 %v1787, %v864
    %v1790 = vadd.f32 %v1788, 1e-06
    %v1791 = vadd.f32 %v1789, 1e-06
    %v1792 = vrsqrt.pop %v1790
    %v1793 = vmul.f32 %v1792, %v1790
    %v1794 = vmul.f32 %v1793, %v1792
    %v1795 = vmul.f32 0.5, %v1794
    %v1796 = vsub.f32 1.5, %v1795
    %v1797 = vmul.f32 %v1792, %v1796
    %vm1798 = vweird.f32 %v1790
    %vm1799 = vweird.f32 %v1792
    %vm1800 = vmor %vm1798, %vm1799
    %v1801 = vsel %vm1800, %v1792, %v1797
    %v1802 = vrsqrt.pop %v1791
    %v1803 = vmul.f32 %v1802, %v1791
    %v1804 = vmul.f32 %v1803, %v1802
    %v1805 = vmul.f32 0.5, %v1804
    %v1806 = vsub.f32 1.5, %v1805
    %v1807 = vmul.f32 %v1802, %v1806
    %vm1808 = vweird.f32 %v1791
    %vm1809 = vweird.f32 %v1802
    %vm1810 = vmor %vm1808, %vm1809
    %v1811 = vsel %vm1810, %v1802, %v1807
    %v1812 = vmul.f32 %v1778, %v1801
    %v1813 = vmul.f32 %v1779, %v1811
    %v1814 = vld [vmem:[%s2 + $0x9] sm:$0x1]
    %v1815 = vperm.slane %v1814, 0
    %v1816 = vmul.f32 %v1812, %v1815
    %v1817 = vmul.f32 %v1813, %v1815
    %v1818 = vld [vmem:[%s2 + $0xa] sm:$0x1]
    %v1819 = vperm.slane %v1818, 0
    %v1820 = vadd.f32 %v1816, %v1819
    %v1821 = vadd.f32 %v1817, %v1819
    %v1822 = vpack.c.bf16 %v1821, %v1820
    %v1823 = vld [vmem:[%s1 + $0x50] sm:$0xf]
    %v1824 = vld [vmem:[%s1 + $0x54] sm:$0xf]
    %v1825 = vld [vmem:[%s1 + $0x58] sm:$0xf]
    %v1826 = vld [vmem:[%s1 + $0x5c] sm:$0xf]
    %v1827 = vld [vmem:[%s2 + $0x5] sm:$0x1]
    %v1828 = vperm.slane %v1827, 0
    %v1833 = vunpack.c.l.b16 %v1823
    %v1834 = vunpack.c.l.b16 %v1824
    %v1835 = vunpack.c.l.b16 %v1825
    %v1836 = vunpack.c.l.b16 %v1826
    %v1837 = vpack.c.b16 %v1834, %v1833
    %v1838 = vpack.c.b16 %v1836, %v1835
    %v1842 = vsel %vm40, %v1822, 0
    %1844 = vmatpush.bf16.msra.mxu0 0
    %1845 = vmatpush.bf16.msra.mxu0 0
    %1846 = vmatpush.bf16.msra.mxu0 0
    %1847 = vmatpush.bf16.msra.mxu0 0
    %1848 = vmatpush.bf16.msra.mxu0 0
    %1849 = vmatpush.bf16.msra.mxu0 0
    %1850 = vmatpush.bf16.msra.mxu0 %v1838
    %1851 = vmatpush.bf16.msra.mxu0 %v1837
    %1852 = vmatmul.bf16.gmra.mxu0 %v1842
    %v1853 = vpop.f32.mrf.mxu0
    %v1854 = vadd.f32 %v1828, %v1853
    %v1855 = vpop.f32.mrf.mxu0
    %v1856 = vadd.f32 %v1828, %v1855
    %1857 = vdwg.mxu0
    %v1858 = vmax.f32 %v1854, 0.0
    %v1859 = vmax.f32 %v1856, 0.0
    %v1860 = vpack.c.bf16 %v1859, %v1858
    %v1861 = vld [vmem:[%s1 + $0x60] sm:$0xf]
    %v1862 = vld [vmem:[%s1 + $0x64] sm:$0xf]
    %v1863 = vld [vmem:[%s1 + $0x68] sm:$0xf]
    %v1864 = vld [vmem:[%s1 + $0x6c] sm:$0xf]
    %v1865 = vld [vmem:[%s1 + $0x70] sm:$0xf]
    %v1866 = vld [vmem:[%s1 + $0x74] sm:$0xf]
    %v1867 = vld [vmem:[%s1 + $0x78] sm:$0xf]
    %v1868 = vld [vmem:[%s1 + $0x7c] sm:$0xf]
    %v1869 = vld [vmem:[%s2 + $0x6] sm:$0x1]
    %v1870 = vperm.slane %v1869, 0
    %v1879 = vunpack.c.l.b16 %v1861
    %v1880 = vunpack.c.l.b16 %v1862
    %v1881 = vunpack.c.l.b16 %v1863
    %v1882 = vunpack.c.l.b16 %v1864
    %v1883 = vunpack.c.l.b16 %v1865
    %v1884 = vunpack.c.l.b16 %v1866
    %v1885 = vunpack.c.l.b16 %v1867
    %v1886 = vunpack.c.l.b16 %v1868
    %v1887 = vpack.c.b16 %v1880, %v1879
    %v1888 = vpack.c.b16 %v1882, %v1881
    %v1889 = vpack.c.b16 %v1884, %v1883
    %v1890 = vpack.c.b16 %v1886, %v1885
    %vm1895 = vcmask 523264
    %v1897 = vsel %vm1895, %v1860, 0
    %1899 = vmatpush.bf16.msra.mxu0 0
    %1900 = vmatpush.bf16.msra.mxu0 0
    %1901 = vmatpush.bf16.msra.mxu0 0
    %1902 = vmatpush.bf16.msra.mxu0 0
    %1903 = vmatpush.bf16.msra.mxu0 %v1890
    %1904 = vmatpush.bf16.msra.mxu0 %v1889
    %1905 = vmatpush.bf16.msra.mxu0 %v1888
    %1906 = vmatpush.bf16.msra.mxu0 %v1887
    %1907 = vmatmul.bf16.gmra.mxu0 %v1897
    %v1908 = vpop.f32.mrf.mxu0
    %v1909 = vadd.f32 %v1870, %v1908
    %v1910 = vpop.f32.mrf.mxu0
    %v1911 = vadd.f32 %v1870, %v1910
    %1912 = vdwg.mxu0
    %v1913 = vadd.f32 %v1909, %v1820
    %v1914 = vadd.f32 %v1911, %v1821
    %v1915 = vsel %vm40, %v1913, 0.0
    %1916 = vadd.xlane.f32.xlu0 %v1915
    %v1917 = vpop.xlane.xlu0 %1916
    %v1918 = vsel %vm40, %v1914, 0.0
    %1919 = vadd.xlane.f32.xlu0 %v1918
    %v1920 = vpop.xlane.xlu0 %1919
    %v1921 = vmul.f32 %v1917, %v864
    %v1922 = vmul.f32 %v1920, %v864
    %v1923 = vsub.f32 %v1913, %v1921
    %v1924 = vsub.f32 %v1914, %v1922
    %v1925 = vmul.f32 %v1923, %v1923
    %v1926 = vmul.f32 %v1924, %v1924
    %v1927 = vsel %vm40, %v1925, 0.0
    %1928 = vadd.xlane.f32.xlu0 %v1927
    %v1929 = vpop.xlane.xlu0 %1928
    %v1930 = vsel %vm40, %v1926, 0.0
    %1931 = vadd.xlane.f32.xlu0 %v1930
    %v1932 = vpop.xlane.xlu0 %1931
    %v1933 = vmul.f32 %v1929, %v864
    %v1934 = vmul.f32 %v1932, %v864
    %v1935 = vadd.f32 %v1933, 1e-06
    %v1936 = vadd.f32 %v1934, 1e-06
    %v1937 = vrsqrt.pop %v1935
    %v1938 = vmul.f32 %v1937, %v1935
    %v1939 = vmul.f32 %v1938, %v1937
    %v1940 = vmul.f32 0.5, %v1939
    %v1941 = vsub.f32 1.5, %v1940
    %v1942 = vmul.f32 %v1937, %v1941
    %vm1943 = vweird.f32 %v1935
    %vm1944 = vweird.f32 %v1937
    %vm1945 = vmor %vm1943, %vm1944
    %v1946 = vsel %vm1945, %v1937, %v1942
    %v1947 = vrsqrt.pop %v1936
    %v1948 = vmul.f32 %v1947, %v1936
    %v1949 = vmul.f32 %v1948, %v1947
    %v1950 = vmul.f32 0.5, %v1949
    %v1951 = vsub.f32 1.5, %v1950
    %v1952 = vmul.f32 %v1947, %v1951
    %vm1953 = vweird.f32 %v1936
    %vm1954 = vweird.f32 %v1947
    %vm1955 = vmor %vm1953, %vm1954
    %v1956 = vsel %vm1955, %v1947, %v1952
    %v1957 = vmul.f32 %v1923, %v1946
    %v1958 = vmul.f32 %v1924, %v1956
    %v1959 = vld [vmem:[%s2 + $0xb] sm:$0x1]
    %v1960 = vperm.slane %v1959, 0
    %v1961 = vmul.f32 %v1957, %v1960
    %v1962 = vmul.f32 %v1958, %v1960
    %v1963 = vld [vmem:[%s2 + $0xc] sm:$0x1]
    %v1964 = vperm.slane %v1963, 0
    %v1965 = vadd.f32 %v1961, %v1964
    %v1966 = vadd.f32 %v1962, %v1964
    %1967 = vst.msk [vmem:[#allocation2] sm:$0xff] %vm40, %v1965
    %1968 = vst.msk [vmem:[#allocation2 + $0x8] sm:$0xff] %vm40, %v1966
    // Predicated region
    $region14: #{decoder_layer_forward.1} parent=1 // pred_check
      _
    $region15: #{decoder_layer_forward.1} parent=1 // pred_check_branch
      %1970 = sbr.rel (0) target = $region17
    $region16: #{decoder_layer_forward.1} parent=1 // pred_region
      %1972 = vsyncadd [#allocation3], 0
      %s1973 = sshll.u32 [#allocation2], 4
      %s1974 = int_to_ptr.vmem [resolvable:$true] %s1973
      %s1975 = sshll.u32 %s3, 4
      %s1976 = int_to_ptr.hbm [resolvable:$true] %s1975
      %1981 = dma.vmem_to_hbm [thread:$0]  %s1974, 256, %s1976, [#allocation3], 128, 128, 8
    $region17: #{decoder_layer_forward.1} parent=1 // pred_fallthru
      _
    // Predicated region
    $region18: #{decoder_layer_forward.1} parent=1 // pred_check
      _
    $region19: #{decoder_layer_forward.1} parent=1 // pred_check_branch
      %1983 = sbr.rel (0) target = $region21
    $region20: #{decoder_layer_forward.1} parent=1 // pred_region
      %1985 = dma.done [#allocation3], 256
    $region21: #{decoder_layer_forward.1} parent=1 // pred_fallthru
      _
    %1986 = vsyncpa [#allocation3], 1

</llo_original>
